<compile_context>
chip_gen: v7x
topology: tpu7x:2x2x1
jax: 0.10.0
libtpu: 0.0.40
codegen_flags: <defaults>
</compile_context>

<pallas_src>
import jax
import jax.numpy as jnp
from jax.experimental import pallas as pl
from jax.experimental.pallas import tpu as pltpu


def _leaky_relu_kernel(slope_ref, x_ref, o_ref):
    """Elementwise leaky_relu. slope_ref is a (1,) f32 SMEM scalar."""
    x = x_ref[...]
    slope = slope_ref[0].astype(x.dtype)
    o_ref[...] = jnp.where(x >= 0, x, x * slope)


# Below this many bytes, the pallas_call launch overhead dominates; plain jnp is
# equal-or-faster and XLA can fuse it with neighbours.
_SMALL_BYPASS_BYTES = 256 * 1024

# Widest lane-dense last dim we try (any multiple of 128 down to 128).
_MAX_LANE_WIDTH = 4096


def _select_block_params():
    """Per-generation block size / scoped-VMEM limit.

    v5e/v6e: 128 MiB physical VMEM, ~1.4 TB/s HBM -> 4 MiB blocks already sit at
             ~85% of the roofline; just raise the scoped limit (v5e default is 16 MiB,
             exactly the double-buffered 4 MiB working set).
    v7x:     64 MiB physical VMEM, 3.2 TB/s HBM -> larger (8 MiB) blocks amortize the
             ~0.35 us fixed per-grid-step cost; keep limit under physical VMEM.
    """
    target_block_bytes = 4 * 1024 * 1024
    vmem_limit_bytes = 48 * 1024 * 1024  # safe on every generation
    try:
        info = pltpu.get_tpu_info()
        vmem_cap = getattr(info, "vmem_capacity_bytes", None)
        if vmem_cap is not None:
            if vmem_cap <= 80 * 1024 * 1024:      # v7x-class (64 MiB per core)
                target_block_bytes = 8 * 1024 * 1024
                vmem_limit_bytes = 48 * 1024 * 1024
            else:                                 # v5e / v6e (128 MiB)
                target_block_bytes = 4 * 1024 * 1024
                vmem_limit_bytes = 64 * 1024 * 1024
    except Exception:
        pass
    return target_block_bytes, vmem_limit_bytes


def _find_width(n):
    """Widest multiple of 128 (<= _MAX_LANE_WIDTH) dividing n, or None."""
    w = min(_MAX_LANE_WIDTH, (n // 128) * 128)
    while w >= 128:
        if n % w == 0:
            return w
        w -= 128
    return None


def _leaky_relu_2d(x2d, slope_arr, dtype, donate_input=False):
    """Run the streaming kernel over a lane-dense (rows, width) slab."""
    rows, width = x2d.shape
    itemsize = jnp.dtype(dtype).itemsize
    target_block_bytes, vmem_limit_bytes = _select_block_params()

    # Native sublane tiling alignment for the row (second-minor) dim.
    row_align = 8 if itemsize >= 4 else (16 if itemsize == 2 else 32)
    max_rows = max(row_align, target_block_bytes // (width * itemsize))

    if rows <= max_rows:
        # Single block covering the full row extent (full-extent dim is always legal).
        tile_rows = rows
    else:
        tile_rows = (max_rows // row_align) * row_align

    grid = (pl.cdiv(rows, tile_rows),)

    return pl.pallas_call(
        _leaky_relu_kernel,
        out_shape=jax.ShapeDtypeStruct((rows, width), dtype),
        grid_spec=pltpu.PrefetchScalarGridSpec(
            num_scalar_prefetch=0,
            grid=grid,
            in_specs=[
                pl.BlockSpec(memory_space=pltpu.MemorySpace.SMEM),  # slope scalar
                pl.BlockSpec((tile_rows, width), lambda i: (i, 0)),
            ],
            out_specs=pl.BlockSpec((tile_rows, width), lambda i: (i, 0)),
        ),
        compiler_params=pltpu.CompilerParams(
            # "parallel" lets the megacore runtime shard the row stream across the
            # two TensorCores on v7x; measured no-op on single-TC v5e/v6e.
            dimension_semantics=("parallel",),
            vmem_limit_bytes=vmem_limit_bytes,
        ),
        # Optional in-place update (requires buffer donation at the jit boundary);
        # halves peak HBM footprint but does not change bandwidth.
        input_output_aliases=({1: 0} if donate_input else {}),
    )(slope_arr, x2d)


def leaky_relu_pallas(x, negative_slope=0.01, donate_input=False):
    """Elementwise leaky_relu on a tensor of arbitrary shape (NCHW in the reference)."""
    orig_shape = x.shape
    dtype = x.dtype
    n = x.size
    if n == 0:
        return x

    # Small-input bypass: kernel launch overhead dominates; XLA's fused elementwise wins.
    if n * jnp.dtype(dtype).itemsize < _SMALL_BYPASS_BYTES:
        slope = jnp.asarray(negative_slope, dtype=dtype)
        return jnp.where(x >= 0, x, x * slope)

    slope_arr = jnp.full((1,), negative_slope, dtype=jnp.float32)
    flat = jnp.ravel(x)

    width = _find_width(n)
    if width is not None:
        # Common case: zero-copy lane-dense view of the whole tensor, single pass.
        out2d = _leaky_relu_2d(flat.reshape(n // width, width), slope_arr, dtype,
                               donate_input=donate_input)
        return out2d.reshape(orig_shape)

    # Ragged fallback (rare thanks to the broad width search): kernel on the
    # 128-aligned prefix, <128-element tail in plain jnp, stitch the two.
    prefix = (n // 128) * 128
    tail = n - prefix
    width = _find_width(prefix)
    prefix_in = flat[:prefix].reshape(prefix // width, width)
    prefix_out = _leaky_relu_2d(prefix_in, slope_arr, dtype).reshape(-1)

    tail_in = flat[prefix:]
    slope_t = jnp.asarray(negative_slope, dtype=dtype)
    tail_out = jnp.where(tail_in >= 0, tail_in, tail_in * slope_t)

    return jnp.concatenate([prefix_out, tail_out]).reshape(orig_shape)


class LeakyReLU:
    """JAX/Pallas mirror of the PyTorch LeakyReLU module (no parameters)."""

    def __call__(self, x, negative_slope=0.01):
        return leaky_relu_pallas(x, negative_slope)


if __name__ == "__main__":
    mod = LeakyReLU()

    # 1) Small NCHW input, consistent with e2cnn GeometricTensor conv tensors
    #    (takes the small-input bypass path).
    x = jax.random.normal(jax.random.PRNGKey(0), (2, 4, 16, 16), dtype=jnp.float32)
    out = jax.block_until_ready(mod(x, negative_slope=0.01))
    ref = jnp.where(x >= 0, x, 0.01 * x)
    assert out.shape == x.shape and out.dtype == x.dtype
    assert jnp.allclose(out, ref, atol=1e-6), "mismatch vs reference (small)"

    # 2) Larger aligned input -> exercises the Pallas streaming kernel.
    xl = jax.random.normal(jax.random.PRNGKey(1), (2, 8, 128, 128), dtype=jnp.float32)
    out_l = jax.block_until_ready(mod(xl, negative_slope=0.01))
    ref_l = jnp.where(xl >= 0, xl, 0.01 * xl)
    assert out_l.shape == xl.shape and out_l.dtype == xl.dtype
    assert jnp.allclose(out_l, ref_l, atol=1e-6), "mismatch vs reference (large)"

    # 3) Large ragged input -> exercises the prefix-kernel + jnp-tail path.
    xr = jax.random.normal(jax.random.PRNGKey(2), (3, 7, 129, 67), dtype=jnp.float32)
    out_r = jax.block_until_ready(mod(xr, negative_slope=0.2))
    ref_r = jnp.where(xr >= 0, xr, 0.2 * xr)
    assert out_r.shape == xr.shape and out_r.dtype == xr.dtype
    assert jnp.allclose(out_r, ref_r, atol=1e-6), "mismatch vs reference (ragged)"

    # 4) bf16 input -> exercises the SMEM f32 scalar + in-kernel dtype cast.
    xb = jax.random.normal(jax.random.PRNGKey(3), (4, 8, 64, 128), dtype=jnp.bfloat16)
    out_b = jax.block_until_ready(mod(xb, negative_slope=0.01))
    ref_b = jnp.where(xb >= 0, xb, xb * jnp.asarray(0.01, dtype=jnp.bfloat16))
    assert out_b.shape == xb.shape and out_b.dtype == xb.dtype
    assert jnp.allclose(out_b.astype(jnp.float32), ref_b.astype(jnp.float32),
                        atol=1e-2), "mismatch vs reference (bf16)"

    print("KERNEL_OK")
</pallas_src>

<mosaic_0001>
module attributes {stable_mosaic.version = 11 : i64} {
  func.func @_leaky_relu_kernel(%arg0: i32, %arg1: memref<1xf32, #tpu.memory_space<smem>>, %arg2: memref<64x4096xf32, #tpu.memory_space<vmem>>, %arg3: memref<64x4096xf32, #tpu.memory_space<vmem>>) attributes {dimension_semantics = [#tpu.dimension_semantics<parallel>], iteration_bounds = array<i64: 1>, scalar_prefetch = 0 : i64, scratch_operands = 0 : i64, tpu.core_type = #tpu.core_type<tc>, window_params = [{transform_indices = @transform_0, window_bounds = array<i64: 1>}, {transform_indices = @transform_1, window_bounds = array<i64: 64, 4096>}, {transform_indices = @transform_2, window_bounds = array<i64: 64, 4096>}]} {
    %c0 = arith.constant 0 : index
    %c0_0 = arith.constant 0 : index
    %0 = vector.load %arg2[%c0, %c0_0] : memref<64x4096xf32, #tpu.memory_space<vmem>>, vector<64x4096xf32>
    %c0_1 = arith.constant 0 : index
    %1 = memref.load %arg1[%c0_1] : memref<1xf32, #tpu.memory_space<smem>>
    %cst = arith.constant 0.000000e+00 : f32
    %2 = vector.broadcast %cst : f32 to vector<64x4096xf32>
    %3 = arith.cmpf oge, %0, %2 : vector<64x4096xf32>
    %4 = vector.broadcast %1 : f32 to vector<64x4096xf32>
    %5 = arith.mulf %0, %4 : vector<64x4096xf32>
    %6 = arith.select %3, %0, %5 : vector<64x4096xi1>, vector<64x4096xf32>
    %c0_2 = arith.constant 0 : index
    %c0_3 = arith.constant 0 : index
    %7 = vector.load %arg3[%c0_2, %c0_3] : memref<64x4096xf32, #tpu.memory_space<vmem>>, vector<64x4096xf32>
    tpu.vector_store %arg3[%c0_2, %c0_3], %6 {strides = array<i32>} : memref<64x4096xf32, #tpu.memory_space<vmem>>, vector<64x4096xf32>,
    return
  }
  func.func @transform_0(%arg0: i32) -> i32 {
    %c0_i32 = arith.constant 0 : i32
    %c0_i32_0 = arith.constant 0 : i32
    return %c0_i32 : i32
  }
  func.func @transform_1(%arg0: i32) -> (i32, i32) {
    %c0_i32 = arith.constant 0 : i32
    %c0_i32_0 = arith.constant 0 : i32
    return %arg0, %c0_i32 : i32, i32
  }
  func.func @transform_2(%arg0: i32) -> (i32, i32) {
    %c0_i32 = arith.constant 0 : i32
    %c0_i32_0 = arith.constant 0 : i32
    return %arg0, %c0_i32 : i32, i32
  }
}

</mosaic_0001>

<llo_original>
// kernel: tpu_custom_call.1
$region0: #{tpu_custom_call.1}
  #allocation0 [shape = 'u32[]', space=smem, size = 0x4, offset = 0x4, fixed_abs, tag = 'smem constant byte address 0x4 - core index']
  #allocation1 [shape = 'u32[144,128]{1,0:T(1,128)}', space=vmem, size = 0x12000, scoped, tag = 'internal scratch']
  #allocation2 [shape = 'f32[1]{0:T(128)S(6)}', space=smem, size = 0x200, scoped, tag = 'scoped memory for tpu_custom_call.1']
  %s0 = inlined_call_operand.<no memory space> [shape: f32[1], index: 0, kind: input, shape index: {}]
  %s1 = inlined_call_operand.hbm [shape: f32[64,4096], index: 1, kind: input, shape index: {}]
  %s2 = inlined_call_operand.hbm [shape: f32[64,4096], index: 2, kind: output, shape index: {}]
  %s3 = sld [smem:[#allocation0]]
  $region22: #{tpu_custom_call.1} parent=0
    _
  %s5 = ssub.s32 1, %s3
  %s6 = scalar_select 0, %s5, %s3
  %7 = sst [smem:[#allocation2]] %s0
  $region1: #{tpu_custom_call.1} parent=0
    #allocation3 [shape = 'u8[1048576]{0}', space=vmem, size = 0x100000, scoped, tag = 'input window, operand 1, single buffered']
    #allocation4 [shape = 's32[1]{0}', space=sflag, size = 0x4, scoped, tag = 'scoped memory for tpu_custom_call.1']
    #allocation5 [shape = 's32[1]{0}', space=sflag, size = 0x4, scoped, tag = 'scoped memory for tpu_custom_call.1']
    #allocation6 [shape = 'u8[1048576]{0}', space=vmem, size = 0x100000, scoped, tag = 'output window, operand 0, single buffered']
    %8 = vsyncpa [#allocation4], 0
    %9 = vsyncpa [#allocation5], 0
    // Predicated region
    $region2: #{tpu_custom_call.1} parent=1 // pred_check
      _
    $region3: #{tpu_custom_call.1} parent=1 // pred_check_branch
      %11 = sbr.rel (0) target = $region5
    $region4: #{tpu_custom_call.1} parent=1 // pred_region
      _
    $region5: #{tpu_custom_call.1} parent=1 // pred_fallthru
      _
    // Predicated region
    $region6: #{tpu_custom_call.1} parent=1 // pred_check
      _
    $region7: #{tpu_custom_call.1} parent=1 // pred_check_branch
      %13 = sbr.rel (0) target = $region9
    $region8: #{tpu_custom_call.1} parent=1 // pred_region
      %s15 = ssub.s32 32768, 32768
      %16 = vsyncadd [#allocation4], %s15
      %s17 = sshll.u32 [#allocation3], 4
      %s18 = int_to_ptr.vmem [resolvable:$true] %s17
      %23 = dma.hbm_to_vmem [thread:$0]  %s1, 32768, %s18, [#allocation4], 4096, 4096, 256
    $region9: #{tpu_custom_call.1} parent=1 // pred_fallthru
      _
    // Predicated region
    $region10: #{tpu_custom_call.1} parent=1 // pred_check
      _
    $region11: #{tpu_custom_call.1} parent=1 // pred_check_branch
      %25 = sbr.rel (0) target = $region13
    $region12: #{tpu_custom_call.1} parent=1 // pred_region
      %26 = dma.done [#allocation4], 32768
    $region13: #{tpu_custom_call.1} parent=1 // pred_fallthru
      _
    %v27 = vld [vmem:[#allocation3] sm:$0xff]
    %v28 = vld [vmem:[#allocation3 + $0x8] sm:$0xff]
    %v29 = vld [vmem:[#allocation3 + $0x10] sm:$0xff]
    %v30 = vld [vmem:[#allocation3 + $0x18] sm:$0xff]
    %v31 = vld [vmem:[#allocation3 + $0x20] sm:$0xff]
    %v32 = vld [vmem:[#allocation3 + $0x28] sm:$0xff]
    %v33 = vld [vmem:[#allocation3 + $0x30] sm:$0xff]
    %v34 = vld [vmem:[#allocation3 + $0x38] sm:$0xff]
    %v35 = vld [vmem:[#allocation3 + $0x40] sm:$0xff]
    %v36 = vld [vmem:[#allocation3 + $0x48] sm:$0xff]
    %v37 = vld [vmem:[#allocation3 + $0x50] sm:$0xff]
    %v38 = vld [vmem:[#allocation3 + $0x58] sm:$0xff]
    %v39 = vld [vmem:[#allocation3 + $0x60] sm:$0xff]
    %v40 = vld [vmem:[#allocation3 + $0x68] sm:$0xff]
    %v41 = vld [vmem:[#allocation3 + $0x70] sm:$0xff]
    %v42 = vld [vmem:[#allocation3 + $0x78] sm:$0xff]
    %v43 = vld [vmem:[#allocation3 + $0x80] sm:$0xff]
    %v44 = vld [vmem:[#allocation3 + $0x88] sm:$0xff]
    %v45 = vld [vmem:[#allocation3 + $0x90] sm:$0xff]
    %v46 = vld [vmem:[#allocation3 + $0x98] sm:$0xff]
    %v47 = vld [vmem:[#allocation3 + $0xa0] sm:$0xff]
    %v48 = vld [vmem:[#allocation3 + $0xa8] sm:$0xff]
    %v49 = vld [vmem:[#allocation3 + $0xb0] sm:$0xff]
    %v50 = vld [vmem:[#allocation3 + $0xb8] sm:$0xff]
    %v51 = vld [vmem:[#allocation3 + $0xc0] sm:$0xff]
    %v52 = vld [vmem:[#allocation3 + $0xc8] sm:$0xff]
    %v53 = vld [vmem:[#allocation3 + $0xd0] sm:$0xff]
    %v54 = vld [vmem:[#allocation3 + $0xd8] sm:$0xff]
    %v55 = vld [vmem:[#allocation3 + $0xe0] sm:$0xff]
    %v56 = vld [vmem:[#allocation3 + $0xe8] sm:$0xff]
    %v57 = vld [vmem:[#allocation3 + $0xf0] sm:$0xff]
    %v58 = vld [vmem:[#allocation3 + $0xf8] sm:$0xff]
    %v59 = vld [vmem:[#allocation3 + $0x100] sm:$0xff]
    %v60 = vld [vmem:[#allocation3 + $0x108] sm:$0xff]
    %v61 = vld [vmem:[#allocation3 + $0x110] sm:$0xff]
    %v62 = vld [vmem:[#allocation3 + $0x118] sm:$0xff]
    %v63 = vld [vmem:[#allocation3 + $0x120] sm:$0xff]
    %v64 = vld [vmem:[#allocation3 + $0x128] sm:$0xff]
    %v65 = vld [vmem:[#allocation3 + $0x130] sm:$0xff]
    %v66 = vld [vmem:[#allocation3 + $0x138] sm:$0xff]
    %v67 = vld [vmem:[#allocation3 + $0x140] sm:$0xff]
    %v68 = vld [vmem:[#allocation3 + $0x148] sm:$0xff]
    %v69 = vld [vmem:[#allocation3 + $0x150] sm:$0xff]
    %v70 = vld [vmem:[#allocation3 + $0x158] sm:$0xff]
    %v71 = vld [vmem:[#allocation3 + $0x160] sm:$0xff]
    %v72 = vld [vmem:[#allocation3 + $0x168] sm:$0xff]
    %v73 = vld [vmem:[#allocation3 + $0x170] sm:$0xff]
    %v74 = vld [vmem:[#allocation3 + $0x178] sm:$0xff]
    %v75 = vld [vmem:[#allocation3 + $0x180] sm:$0xff]
    %v76 = vld [vmem:[#allocation3 + $0x188] sm:$0xff]
    %v77 = vld [vmem:[#allocation3 + $0x190] sm:$0xff]
    %v78 = vld [vmem:[#allocation3 + $0x198] sm:$0xff]
    %v79 = vld [vmem:[#allocation3 + $0x1a0] sm:$0xff]
    %v80 = vld [vmem:[#allocation3 + $0x1a8] sm:$0xff]
    %v81 = vld [vmem:[#allocation3 + $0x1b0] sm:$0xff]
    %v82 = vld [vmem:[#allocation3 + $0x1b8] sm:$0xff]
    %v83 = vld [vmem:[#allocation3 + $0x1c0] sm:$0xff]
    %v84 = vld [vmem:[#allocation3 + $0x1c8] sm:$0xff]
    %v85 = vld [vmem:[#allocation3 + $0x1d0] sm:$0xff]
    %v86 = vld [vmem:[#allocation3 + $0x1d8] sm:$0xff]
    %v87 = vld [vmem:[#allocation3 + $0x1e0] sm:$0xff]
    %v88 = vld [vmem:[#allocation3 + $0x1e8] sm:$0xff]
    %v89 = vld [vmem:[#allocation3 + $0x1f0] sm:$0xff]
    %v90 = vld [vmem:[#allocation3 + $0x1f8] sm:$0xff]
    %v91 = vld [vmem:[#allocation3 + $0x200] sm:$0xff]
    %v92 = vld [vmem:[#allocation3 + $0x208] sm:$0xff]
    %v93 = vld [vmem:[#allocation3 + $0x210] sm:$0xff]
    %v94 = vld [vmem:[#allocation3 + $0x218] sm:$0xff]
    %v95 = vld [vmem:[#allocation3 + $0x220] sm:$0xff]
    %v96 = vld [vmem:[#allocation3 + $0x228] sm:$0xff]
    %v97 = vld [vmem:[#allocation3 + $0x230] sm:$0xff]
    %v98 = vld [vmem:[#allocation3 + $0x238] sm:$0xff]
    %v99 = vld [vmem:[#allocation3 + $0x240] sm:$0xff]
    %v100 = vld [vmem:[#allocation3 + $0x248] sm:$0xff]
    %v101 = vld [vmem:[#allocation3 + $0x250] sm:$0xff]
    %v102 = vld [vmem:[#allocation3 + $0x258] sm:$0xff]
    %v103 = vld [vmem:[#allocation3 + $0x260] sm:$0xff]
    %v104 = vld [vmem:[#allocation3 + $0x268] sm:$0xff]
    %v105 = vld [vmem:[#allocation3 + $0x270] sm:$0xff]
    %v106 = vld [vmem:[#allocation3 + $0x278] sm:$0xff]
    %v107 = vld [vmem:[#allocation3 + $0x280] sm:$0xff]
    %v108 = vld [vmem:[#allocation3 + $0x288] sm:$0xff]
    %v109 = vld [vmem:[#allocation3 + $0x290] sm:$0xff]
    %v110 = vld [vmem:[#allocation3 + $0x298] sm:$0xff]
    %v111 = vld [vmem:[#allocation3 + $0x2a0] sm:$0xff]
    %v112 = vld [vmem:[#allocation3 + $0x2a8] sm:$0xff]
    %v113 = vld [vmem:[#allocation3 + $0x2b0] sm:$0xff]
    %v114 = vld [vmem:[#allocation3 + $0x2b8] sm:$0xff]
    %v115 = vld [vmem:[#allocation3 + $0x2c0] sm:$0xff]
    %v116 = vld [vmem:[#allocation3 + $0x2c8] sm:$0xff]
    %v117 = vld [vmem:[#allocation3 + $0x2d0] sm:$0xff]
    %v118 = vld [vmem:[#allocation3 + $0x2d8] sm:$0xff]
    %v119 = vld [vmem:[#allocation3 + $0x2e0] sm:$0xff]
    %v120 = vld [vmem:[#allocation3 + $0x2e8] sm:$0xff]
    %v121 = vld [vmem:[#allocation3 + $0x2f0] sm:$0xff]
    %v122 = vld [vmem:[#allocation3 + $0x2f8] sm:$0xff]
    %v123 = vld [vmem:[#allocation3 + $0x300] sm:$0xff]
    %v124 = vld [vmem:[#allocation3 + $0x308] sm:$0xff]
    %v125 = vld [vmem:[#allocation3 + $0x310] sm:$0xff]
    %v126 = vld [vmem:[#allocation3 + $0x318] sm:$0xff]
    %v127 = vld [vmem:[#allocation3 + $0x320] sm:$0xff]
    %v128 = vld [vmem:[#allocation3 + $0x328] sm:$0xff]
    %v129 = vld [vmem:[#allocation3 + $0x330] sm:$0xff]
    %v130 = vld [vmem:[#allocation3 + $0x338] sm:$0xff]
    %v131 = vld [vmem:[#allocation3 + $0x340] sm:$0xff]
    %v132 = vld [vmem:[#allocation3 + $0x348] sm:$0xff]
    %v133 = vld [vmem:[#allocation3 + $0x350] sm:$0xff]
    %v134 = vld [vmem:[#allocation3 + $0x358] sm:$0xff]
    %v135 = vld [vmem:[#allocation3 + $0x360] sm:$0xff]
    %v136 = vld [vmem:[#allocation3 + $0x368] sm:$0xff]
    %v137 = vld [vmem:[#allocation3 + $0x370] sm:$0xff]
    %v138 = vld [vmem:[#allocation3 + $0x378] sm:$0xff]
    %v139 = vld [vmem:[#allocation3 + $0x380] sm:$0xff]
    %v140 = vld [vmem:[#allocation3 + $0x388] sm:$0xff]
    %v141 = vld [vmem:[#allocation3 + $0x390] sm:$0xff]
    %v142 = vld [vmem:[#allocation3 + $0x398] sm:$0xff]
    %v143 = vld [vmem:[#allocation3 + $0x3a0] sm:$0xff]
    %v144 = vld [vmem:[#allocation3 + $0x3a8] sm:$0xff]
    %v145 = vld [vmem:[#allocation3 + $0x3b0] sm:$0xff]
    %v146 = vld [vmem:[#allocation3 + $0x3b8] sm:$0xff]
    %v147 = vld [vmem:[#allocation3 + $0x3c0] sm:$0xff]
    %v148 = vld [vmem:[#allocation3 + $0x3c8] sm:$0xff]
    %v149 = vld [vmem:[#allocation3 + $0x3d0] sm:$0xff]
    %v150 = vld [vmem:[#allocation3 + $0x3d8] sm:$0xff]
    %v151 = vld [vmem:[#allocation3 + $0x3e0] sm:$0xff]
    %v152 = vld [vmem:[#allocation3 + $0x3e8] sm:$0xff]
    %v153 = vld [vmem:[#allocation3 + $0x3f0] sm:$0xff]
    %v154 = vld [vmem:[#allocation3 + $0x3f8] sm:$0xff]
    %v155 = vld [vmem:[#allocation3 + $0x400] sm:$0xff]
    %v156 = vld [vmem:[#allocation3 + $0x408] sm:$0xff]
    %v157 = vld [vmem:[#allocation3 + $0x410] sm:$0xff]
    %v158 = vld [vmem:[#allocation3 + $0x418] sm:$0xff]
    %v159 = vld [vmem:[#allocation3 + $0x420] sm:$0xff]
    %v160 = vld [vmem:[#allocation3 + $0x428] sm:$0xff]
    %v161 = vld [vmem:[#allocation3 + $0x430] sm:$0xff]
    %v162 = vld [vmem:[#allocation3 + $0x438] sm:$0xff]
    %v163 = vld [vmem:[#allocation3 + $0x440] sm:$0xff]
    %v164 = vld [vmem:[#allocation3 + $0x448] sm:$0xff]
    %v165 = vld [vmem:[#allocation3 + $0x450] sm:$0xff]
    %v166 = vld [vmem:[#allocation3 + $0x458] sm:$0xff]
    %v167 = vld [vmem:[#allocation3 + $0x460] sm:$0xff]
    %v168 = vld [vmem:[#allocation3 + $0x468] sm:$0xff]
    %v169 = vld [vmem:[#allocation3 + $0x470] sm:$0xff]
    %v170 = vld [vmem:[#allocation3 + $0x478] sm:$0xff]
    %v171 = vld [vmem:[#allocation3 + $0x480] sm:$0xff]
    %v172 = vld [vmem:[#allocation3 + $0x488] sm:$0xff]
    %v173 = vld [vmem:[#allocation3 + $0x490] sm:$0xff]
    %v174 = vld [vmem:[#allocation3 + $0x498] sm:$0xff]
    %v175 = vld [vmem:[#allocation3 + $0x4a0] sm:$0xff]
    %v176 = vld [vmem:[#allocation3 + $0x4a8] sm:$0xff]
    %v177 = vld [vmem:[#allocation3 + $0x4b0] sm:$0xff]
    %v178 = vld [vmem:[#allocation3 + $0x4b8] sm:$0xff]
    %v179 = vld [vmem:[#allocation3 + $0x4c0] sm:$0xff]
    %v180 = vld [vmem:[#allocation3 + $0x4c8] sm:$0xff]
    %v181 = vld [vmem:[#allocation3 + $0x4d0] sm:$0xff]
    %v182 = vld [vmem:[#allocation3 + $0x4d8] sm:$0xff]
    %v183 = vld [vmem:[#allocation3 + $0x4e0] sm:$0xff]
    %v184 = vld [vmem:[#allocation3 + $0x4e8] sm:$0xff]
    %v185 = vld [vmem:[#allocation3 + $0x4f0] sm:$0xff]
    %v186 = vld [vmem:[#allocation3 + $0x4f8] sm:$0xff]
    %v187 = vld [vmem:[#allocation3 + $0x500] sm:$0xff]
    %v188 = vld [vmem:[#allocation3 + $0x508] sm:$0xff]
    %v189 = vld [vmem:[#allocation3 + $0x510] sm:$0xff]
    %v190 = vld [vmem:[#allocation3 + $0x518] sm:$0xff]
    %v191 = vld [vmem:[#allocation3 + $0x520] sm:$0xff]
    %v192 = vld [vmem:[#allocation3 + $0x528] sm:$0xff]
    %v193 = vld [vmem:[#allocation3 + $0x530] sm:$0xff]
    %v194 = vld [vmem:[#allocation3 + $0x538] sm:$0xff]
    %v195 = vld [vmem:[#allocation3 + $0x540] sm:$0xff]
    %v196 = vld [vmem:[#allocation3 + $0x548] sm:$0xff]
    %v197 = vld [vmem:[#allocation3 + $0x550] sm:$0xff]
    %v198 = vld [vmem:[#allocation3 + $0x558] sm:$0xff]
    %v199 = vld [vmem:[#allocation3 + $0x560] sm:$0xff]
    %v200 = vld [vmem:[#allocation3 + $0x568] sm:$0xff]
    %v201 = vld [vmem:[#allocation3 + $0x570] sm:$0xff]
    %v202 = vld [vmem:[#allocation3 + $0x578] sm:$0xff]
    %v203 = vld [vmem:[#allocation3 + $0x580] sm:$0xff]
    %v204 = vld [vmem:[#allocation3 + $0x588] sm:$0xff]
    %v205 = vld [vmem:[#allocation3 + $0x590] sm:$0xff]
    %v206 = vld [vmem:[#allocation3 + $0x598] sm:$0xff]
    %v207 = vld [vmem:[#allocation3 + $0x5a0] sm:$0xff]
    %v208 = vld [vmem:[#allocation3 + $0x5a8] sm:$0xff]
    %v209 = vld [vmem:[#allocation3 + $0x5b0] sm:$0xff]
    %v210 = vld [vmem:[#allocation3 + $0x5b8] sm:$0xff]
    %v211 = vld [vmem:[#allocation3 + $0x5c0] sm:$0xff]
    %v212 = vld [vmem:[#allocation3 + $0x5c8] sm:$0xff]
    %v213 = vld [vmem:[#allocation3 + $0x5d0] sm:$0xff]
    %v214 = vld [vmem:[#allocation3 + $0x5d8] sm:$0xff]
    %v215 = vld [vmem:[#allocation3 + $0x5e0] sm:$0xff]
    %v216 = vld [vmem:[#allocation3 + $0x5e8] sm:$0xff]
    %v217 = vld [vmem:[#allocation3 + $0x5f0] sm:$0xff]
    %v218 = vld [vmem:[#allocation3 + $0x5f8] sm:$0xff]
    %v219 = vld [vmem:[#allocation3 + $0x600] sm:$0xff]
    %v220 = vld [vmem:[#allocation3 + $0x608] sm:$0xff]
    %v221 = vld [vmem:[#allocation3 + $0x610] sm:$0xff]
    %v222 = vld [vmem:[#allocation3 + $0x618] sm:$0xff]
    %v223 = vld [vmem:[#allocation3 + $0x620] sm:$0xff]
    %v224 = vld [vmem:[#allocation3 + $0x628] sm:$0xff]
    %v225 = vld [vmem:[#allocation3 + $0x630] sm:$0xff]
    %v226 = vld [vmem:[#allocation3 + $0x638] sm:$0xff]
    %v227 = vld [vmem:[#allocation3 + $0x640] sm:$0xff]
    %v228 = vld [vmem:[#allocation3 + $0x648] sm:$0xff]
    %v229 = vld [vmem:[#allocation3 + $0x650] sm:$0xff]
    %v230 = vld [vmem:[#allocation3 + $0x658] sm:$0xff]
    %v231 = vld [vmem:[#allocation3 + $0x660] sm:$0xff]
    %v232 = vld [vmem:[#allocation3 + $0x668] sm:$0xff]
    %v233 = vld [vmem:[#allocation3 + $0x670] sm:$0xff]
    %v234 = vld [vmem:[#allocation3 + $0x678] sm:$0xff]
    %v235 = vld [vmem:[#allocation3 + $0x680] sm:$0xff]
    %v236 = vld [vmem:[#allocation3 + $0x688] sm:$0xff]
    %v237 = vld [vmem:[#allocation3 + $0x690] sm:$0xff]
    %v238 = vld [vmem:[#allocation3 + $0x698] sm:$0xff]
    %v239 = vld [vmem:[#allocation3 + $0x6a0] sm:$0xff]
    %v240 = vld [vmem:[#allocation3 + $0x6a8] sm:$0xff]
    %v241 = vld [vmem:[#allocation3 + $0x6b0] sm:$0xff]
    %v242 = vld [vmem:[#allocation3 + $0x6b8] sm:$0xff]
    %v243 = vld [vmem:[#allocation3 + $0x6c0] sm:$0xff]
    %v244 = vld [vmem:[#allocation3 + $0x6c8] sm:$0xff]
    %v245 = vld [vmem:[#allocation3 + $0x6d0] sm:$0xff]
    %v246 = vld [vmem:[#allocation3 + $0x6d8] sm:$0xff]
    %v247 = vld [vmem:[#allocation3 + $0x6e0] sm:$0xff]
    %v248 = vld [vmem:[#allocation3 + $0x6e8] sm:$0xff]
    %v249 = vld [vmem:[#allocation3 + $0x6f0] sm:$0xff]
    %v250 = vld [vmem:[#allocation3 + $0x6f8] sm:$0xff]
    %v251 = vld [vmem:[#allocation3 + $0x700] sm:$0xff]
    %v252 = vld [vmem:[#allocation3 + $0x708] sm:$0xff]
    %v253 = vld [vmem:[#allocation3 + $0x710] sm:$0xff]
    %v254 = vld [vmem:[#allocation3 + $0x718] sm:$0xff]
    %v255 = vld [vmem:[#allocation3 + $0x720] sm:$0xff]
    %v256 = vld [vmem:[#allocation3 + $0x728] sm:$0xff]
    %v257 = vld [vmem:[#allocation3 + $0x730] sm:$0xff]
    %v258 = vld [vmem:[#allocation3 + $0x738] sm:$0xff]
    %v259 = vld [vmem:[#allocation3 + $0x740] sm:$0xff]
    %v260 = vld [vmem:[#allocation3 + $0x748] sm:$0xff]
    %v261 = vld [vmem:[#allocation3 + $0x750] sm:$0xff]
    %v262 = vld [vmem:[#allocation3 + $0x758] sm:$0xff]
    %v263 = vld [vmem:[#allocation3 + $0x760] sm:$0xff]
    %v264 = vld [vmem:[#allocation3 + $0x768] sm:$0xff]
    %v265 = vld [vmem:[#allocation3 + $0x770] sm:$0xff]
    %v266 = vld [vmem:[#allocation3 + $0x778] sm:$0xff]
    %v267 = vld [vmem:[#allocation3 + $0x780] sm:$0xff]
    %v268 = vld [vmem:[#allocation3 + $0x788] sm:$0xff]
    %v269 = vld [vmem:[#allocation3 + $0x790] sm:$0xff]
    %v270 = vld [vmem:[#allocation3 + $0x798] sm:$0xff]
    %v271 = vld [vmem:[#allocation3 + $0x7a0] sm:$0xff]
    %v272 = vld [vmem:[#allocation3 + $0x7a8] sm:$0xff]
    %v273 = vld [vmem:[#allocation3 + $0x7b0] sm:$0xff]
    %v274 = vld [vmem:[#allocation3 + $0x7b8] sm:$0xff]
    %v275 = vld [vmem:[#allocation3 + $0x7c0] sm:$0xff]
    %v276 = vld [vmem:[#allocation3 + $0x7c8] sm:$0xff]
    %v277 = vld [vmem:[#allocation3 + $0x7d0] sm:$0xff]
    %v278 = vld [vmem:[#allocation3 + $0x7d8] sm:$0xff]
    %v279 = vld [vmem:[#allocation3 + $0x7e0] sm:$0xff]
    %v280 = vld [vmem:[#allocation3 + $0x7e8] sm:$0xff]
    %v281 = vld [vmem:[#allocation3 + $0x7f0] sm:$0xff]
    %v282 = vld [vmem:[#allocation3 + $0x7f8] sm:$0xff]
    %s283 = sld [smem:[#allocation2]]
    %vm284 = vcmp.ge.f32.partialorder %v27, 0.0
    %vm285 = vcmp.ge.f32.partialorder %v28, 0.0
    %vm286 = vcmp.ge.f32.partialorder %v29, 0.0
    %vm287 = vcmp.ge.f32.partialorder %v30, 0.0
    %vm288 = vcmp.ge.f32.partialorder %v31, 0.0
    %vm289 = vcmp.ge.f32.partialorder %v32, 0.0
    %vm290 = vcmp.ge.f32.partialorder %v33, 0.0
    %vm291 = vcmp.ge.f32.partialorder %v34, 0.0
    %vm292 = vcmp.ge.f32.partialorder %v35, 0.0
    %vm293 = vcmp.ge.f32.partialorder %v36, 0.0
    %vm294 = vcmp.ge.f32.partialorder %v37, 0.0
    %vm295 = vcmp.ge.f32.partialorder %v38, 0.0
    %vm296 = vcmp.ge.f32.partialorder %v39, 0.0
    %vm297 = vcmp.ge.f32.partialorder %v40, 0.0
    %vm298 = vcmp.ge.f32.partialorder %v41, 0.0
    %vm299 = vcmp.ge.f32.partialorder %v42, 0.0
    %vm300 = vcmp.ge.f32.partialorder %v43, 0.0
    %vm301 = vcmp.ge.f32.partialorder %v44, 0.0
    %vm302 = vcmp.ge.f32.partialorder %v45, 0.0
    %vm303 = vcmp.ge.f32.partialorder %v46, 0.0
    %vm304 = vcmp.ge.f32.partialorder %v47, 0.0
    %vm305 = vcmp.ge.f32.partialorder %v48, 0.0
    %vm306 = vcmp.ge.f32.partialorder %v49, 0.0
    %vm307 = vcmp.ge.f32.partialorder %v50, 0.0
    %vm308 = vcmp.ge.f32.partialorder %v51, 0.0
    %vm309 = vcmp.ge.f32.partialorder %v52, 0.0
    %vm310 = vcmp.ge.f32.partialorder %v53, 0.0
    %vm311 = vcmp.ge.f32.partialorder %v54, 0.0
    %vm312 = vcmp.ge.f32.partialorder %v55, 0.0
    %vm313 = vcmp.ge.f32.partialorder %v56, 0.0
    %vm314 = vcmp.ge.f32.partialorder %v57, 0.0
    %vm315 = vcmp.ge.f32.partialorder %v58, 0.0
    %vm316 = vcmp.ge.f32.partialorder %v59, 0.0
    %vm317 = vcmp.ge.f32.partialorder %v60, 0.0
    %vm318 = vcmp.ge.f32.partialorder %v61, 0.0
    %vm319 = vcmp.ge.f32.partialorder %v62, 0.0
    %vm320 = vcmp.ge.f32.partialorder %v63, 0.0
    %vm321 = vcmp.ge.f32.partialorder %v64, 0.0
    %vm322 = vcmp.ge.f32.partialorder %v65, 0.0
    %vm323 = vcmp.ge.f32.partialorder %v66, 0.0
    %vm324 = vcmp.ge.f32.partialorder %v67, 0.0
    %vm325 = vcmp.ge.f32.partialorder %v68, 0.0
    %vm326 = vcmp.ge.f32.partialorder %v69, 0.0
    %vm327 = vcmp.ge.f32.partialorder %v70, 0.0
    %vm328 = vcmp.ge.f32.partialorder %v71, 0.0
    %vm329 = vcmp.ge.f32.partialorder %v72, 0.0
    %vm330 = vcmp.ge.f32.partialorder %v73, 0.0
    %vm331 = vcmp.ge.f32.partialorder %v74, 0.0
    %vm332 = vcmp.ge.f32.partialorder %v75, 0.0
    %vm333 = vcmp.ge.f32.partialorder %v76, 0.0
    %vm334 = vcmp.ge.f32.partialorder %v77, 0.0
    %vm335 = vcmp.ge.f32.partialorder %v78, 0.0
    %vm336 = vcmp.ge.f32.partialorder %v79, 0.0
    %vm337 = vcmp.ge.f32.partialorder %v80, 0.0
    %vm338 = vcmp.ge.f32.partialorder %v81, 0.0
    %vm339 = vcmp.ge.f32.partialorder %v82, 0.0
    %vm340 = vcmp.ge.f32.partialorder %v83, 0.0
    %vm341 = vcmp.ge.f32.partialorder %v84, 0.0
    %vm342 = vcmp.ge.f32.partialorder %v85, 0.0
    %vm343 = vcmp.ge.f32.partialorder %v86, 0.0
    %vm344 = vcmp.ge.f32.partialorder %v87, 0.0
    %vm345 = vcmp.ge.f32.partialorder %v88, 0.0
    %vm346 = vcmp.ge.f32.partialorder %v89, 0.0
    %vm347 = vcmp.ge.f32.partialorder %v90, 0.0
    %vm348 = vcmp.ge.f32.partialorder %v91, 0.0
    %vm349 = vcmp.ge.f32.partialorder %v92, 0.0
    %vm350 = vcmp.ge.f32.partialorder %v93, 0.0
    %vm351 = vcmp.ge.f32.partialorder %v94, 0.0
    %vm352 = vcmp.ge.f32.partialorder %v95, 0.0
    %vm353 = vcmp.ge.f32.partialorder %v96, 0.0
    %vm354 = vcmp.ge.f32.partialorder %v97, 0.0
    %vm355 = vcmp.ge.f32.partialorder %v98, 0.0
    %vm356 = vcmp.ge.f32.partialorder %v99, 0.0
    %vm357 = vcmp.ge.f32.partialorder %v100, 0.0
    %vm358 = vcmp.ge.f32.partialorder %v101, 0.0
    %vm359 = vcmp.ge.f32.partialorder %v102, 0.0
    %vm360 = vcmp.ge.f32.partialorder %v103, 0.0
    %vm361 = vcmp.ge.f32.partialorder %v104, 0.0
    %vm362 = vcmp.ge.f32.partialorder %v105, 0.0
    %vm363 = vcmp.ge.f32.partialorder %v106, 0.0
    %vm364 = vcmp.ge.f32.partialorder %v107, 0.0
    %vm365 = vcmp.ge.f32.partialorder %v108, 0.0
    %vm366 = vcmp.ge.f32.partialorder %v109, 0.0
    %vm367 = vcmp.ge.f32.partialorder %v110, 0.0
    %vm368 = vcmp.ge.f32.partialorder %v111, 0.0
    %vm369 = vcmp.ge.f32.partialorder %v112, 0.0
    %vm370 = vcmp.ge.f32.partialorder %v113, 0.0
    %vm371 = vcmp.ge.f32.partialorder %v114, 0.0
    %vm372 = vcmp.ge.f32.partialorder %v115, 0.0
    %vm373 = vcmp.ge.f32.partialorder %v116, 0.0
    %vm374 = vcmp.ge.f32.partialorder %v117, 0.0
    %vm375 = vcmp.ge.f32.partialorder %v118, 0.0
    %vm376 = vcmp.ge.f32.partialorder %v119, 0.0
    %vm377 = vcmp.ge.f32.partialorder %v120, 0.0
    %vm378 = vcmp.ge.f32.partialorder %v121, 0.0
    %vm379 = vcmp.ge.f32.partialorder %v122, 0.0
    %vm380 = vcmp.ge.f32.partialorder %v123, 0.0
    %vm381 = vcmp.ge.f32.partialorder %v124, 0.0
    %vm382 = vcmp.ge.f32.partialorder %v125, 0.0
    %vm383 = vcmp.ge.f32.partialorder %v126, 0.0
    %vm384 = vcmp.ge.f32.partialorder %v127, 0.0
    %vm385 = vcmp.ge.f32.partialorder %v128, 0.0
    %vm386 = vcmp.ge.f32.partialorder %v129, 0.0
    %vm387 = vcmp.ge.f32.partialorder %v130, 0.0
    %vm388 = vcmp.ge.f32.partialorder %v131, 0.0
    %vm389 = vcmp.ge.f32.partialorder %v132, 0.0
    %vm390 = vcmp.ge.f32.partialorder %v133, 0.0
    %vm391 = vcmp.ge.f32.partialorder %v134, 0.0
    %vm392 = vcmp.ge.f32.partialorder %v135, 0.0
    %vm393 = vcmp.ge.f32.partialorder %v136, 0.0
    %vm394 = vcmp.ge.f32.partialorder %v137, 0.0
    %vm395 = vcmp.ge.f32.partialorder %v138, 0.0
    %vm396 = vcmp.ge.f32.partialorder %v139, 0.0
    %vm397 = vcmp.ge.f32.partialorder %v140, 0.0
    %vm398 = vcmp.ge.f32.partialorder %v141, 0.0
    %vm399 = vcmp.ge.f32.partialorder %v142, 0.0
    %vm400 = vcmp.ge.f32.partialorder %v143, 0.0
    %vm401 = vcmp.ge.f32.partialorder %v144, 0.0
    %vm402 = vcmp.ge.f32.partialorder %v145, 0.0
    %vm403 = vcmp.ge.f32.partialorder %v146, 0.0
    %vm404 = vcmp.ge.f32.partialorder %v147, 0.0
    %vm405 = vcmp.ge.f32.partialorder %v148, 0.0
    %vm406 = vcmp.ge.f32.partialorder %v149, 0.0
    %vm407 = vcmp.ge.f32.partialorder %v150, 0.0
    %vm408 = vcmp.ge.f32.partialorder %v151, 0.0
    %vm409 = vcmp.ge.f32.partialorder %v152, 0.0
    %vm410 = vcmp.ge.f32.partialorder %v153, 0.0
    %vm411 = vcmp.ge.f32.partialorder %v154, 0.0
    %vm412 = vcmp.ge.f32.partialorder %v155, 0.0
    %vm413 = vcmp.ge.f32.partialorder %v156, 0.0
    %vm414 = vcmp.ge.f32.partialorder %v157, 0.0
    %vm415 = vcmp.ge.f32.partialorder %v158, 0.0
    %vm416 = vcmp.ge.f32.partialorder %v159, 0.0
    %vm417 = vcmp.ge.f32.partialorder %v160, 0.0
    %vm418 = vcmp.ge.f32.partialorder %v161, 0.0
    %vm419 = vcmp.ge.f32.partialorder %v162, 0.0
    %vm420 = vcmp.ge.f32.partialorder %v163, 0.0
    %vm421 = vcmp.ge.f32.partialorder %v164, 0.0
    %vm422 = vcmp.ge.f32.partialorder %v165, 0.0
    %vm423 = vcmp.ge.f32.partialorder %v166, 0.0
    %vm424 = vcmp.ge.f32.partialorder %v167, 0.0
    %vm425 = vcmp.ge.f32.partialorder %v168, 0.0
    %vm426 = vcmp.ge.f32.partialorder %v169, 0.0
    %vm427 = vcmp.ge.f32.partialorder %v170, 0.0
    %vm428 = vcmp.ge.f32.partialorder %v171, 0.0
    %vm429 = vcmp.ge.f32.partialorder %v172, 0.0
    %vm430 = vcmp.ge.f32.partialorder %v173, 0.0
    %vm431 = vcmp.ge.f32.partialorder %v174, 0.0
    %vm432 = vcmp.ge.f32.partialorder %v175, 0.0
    %vm433 = vcmp.ge.f32.partialorder %v176, 0.0
    %vm434 = vcmp.ge.f32.partialorder %v177, 0.0
    %vm435 = vcmp.ge.f32.partialorder %v178, 0.0
    %vm436 = vcmp.ge.f32.partialorder %v179, 0.0
    %vm437 = vcmp.ge.f32.partialorder %v180, 0.0
    %vm438 = vcmp.ge.f32.partialorder %v181, 0.0
    %vm439 = vcmp.ge.f32.partialorder %v182, 0.0
    %vm440 = vcmp.ge.f32.partialorder %v183, 0.0
    %vm441 = vcmp.ge.f32.partialorder %v184, 0.0
    %vm442 = vcmp.ge.f32.partialorder %v185, 0.0
    %vm443 = vcmp.ge.f32.partialorder %v186, 0.0
    %vm444 = vcmp.ge.f32.partialorder %v187, 0.0
    %vm445 = vcmp.ge.f32.partialorder %v188, 0.0
    %vm446 = vcmp.ge.f32.partialorder %v189, 0.0
    %vm447 = vcmp.ge.f32.partialorder %v190, 0.0
    %vm448 = vcmp.ge.f32.partialorder %v191, 0.0
    %vm449 = vcmp.ge.f32.partialorder %v192, 0.0
    %vm450 = vcmp.ge.f32.partialorder %v193, 0.0
    %vm451 = vcmp.ge.f32.partialorder %v194, 0.0
    %vm452 = vcmp.ge.f32.partialorder %v195, 0.0
    %vm453 = vcmp.ge.f32.partialorder %v196, 0.0
    %vm454 = vcmp.ge.f32.partialorder %v197, 0.0
    %vm455 = vcmp.ge.f32.partialorder %v198, 0.0
    %vm456 = vcmp.ge.f32.partialorder %v199, 0.0
    %vm457 = vcmp.ge.f32.partialorder %v200, 0.0
    %vm458 = vcmp.ge.f32.partialorder %v201, 0.0
    %vm459 = vcmp.ge.f32.partialorder %v202, 0.0
    %vm460 = vcmp.ge.f32.partialorder %v203, 0.0
    %vm461 = vcmp.ge.f32.partialorder %v204, 0.0
    %vm462 = vcmp.ge.f32.partialorder %v205, 0.0
    %vm463 = vcmp.ge.f32.partialorder %v206, 0.0
    %vm464 = vcmp.ge.f32.partialorder %v207, 0.0
    %vm465 = vcmp.ge.f32.partialorder %v208, 0.0
    %vm466 = vcmp.ge.f32.partialorder %v209, 0.0
    %vm467 = vcmp.ge.f32.partialorder %v210, 0.0
    %vm468 = vcmp.ge.f32.partialorder %v211, 0.0
    %vm469 = vcmp.ge.f32.partialorder %v212, 0.0
    %vm470 = vcmp.ge.f32.partialorder %v213, 0.0
    %vm471 = vcmp.ge.f32.partialorder %v214, 0.0
    %vm472 = vcmp.ge.f32.partialorder %v215, 0.0
    %vm473 = vcmp.ge.f32.partialorder %v216, 0.0
    %vm474 = vcmp.ge.f32.partialorder %v217, 0.0
    %vm475 = vcmp.ge.f32.partialorder %v218, 0.0
    %vm476 = vcmp.ge.f32.partialorder %v219, 0.0
    %vm477 = vcmp.ge.f32.partialorder %v220, 0.0
    %vm478 = vcmp.ge.f32.partialorder %v221, 0.0
    %vm479 = vcmp.ge.f32.partialorder %v222, 0.0
    %vm480 = vcmp.ge.f32.partialorder %v223, 0.0
    %vm481 = vcmp.ge.f32.partialorder %v224, 0.0
    %vm482 = vcmp.ge.f32.partialorder %v225, 0.0
    %vm483 = vcmp.ge.f32.partialorder %v226, 0.0
    %vm484 = vcmp.ge.f32.partialorder %v227, 0.0
    %vm485 = vcmp.ge.f32.partialorder %v228, 0.0
    %vm486 = vcmp.ge.f32.partialorder %v229, 0.0
    %vm487 = vcmp.ge.f32.partialorder %v230, 0.0
    %vm488 = vcmp.ge.f32.partialorder %v231, 0.0
    %vm489 = vcmp.ge.f32.partialorder %v232, 0.0
    %vm490 = vcmp.ge.f32.partialorder %v233, 0.0
    %vm491 = vcmp.ge.f32.partialorder %v234, 0.0
    %vm492 = vcmp.ge.f32.partialorder %v235, 0.0
    %vm493 = vcmp.ge.f32.partialorder %v236, 0.0
    %vm494 = vcmp.ge.f32.partialorder %v237, 0.0
    %vm495 = vcmp.ge.f32.partialorder %v238, 0.0
    %vm496 = vcmp.ge.f32.partialorder %v239, 0.0
    %vm497 = vcmp.ge.f32.partialorder %v240, 0.0
    %vm498 = vcmp.ge.f32.partialorder %v241, 0.0
    %vm499 = vcmp.ge.f32.partialorder %v242, 0.0
    %vm500 = vcmp.ge.f32.partialorder %v243, 0.0
    %vm501 = vcmp.ge.f32.partialorder %v244, 0.0
    %vm502 = vcmp.ge.f32.partialorder %v245, 0.0
    %vm503 = vcmp.ge.f32.partialorder %v246, 0.0
    %vm504 = vcmp.ge.f32.partialorder %v247, 0.0
    %vm505 = vcmp.ge.f32.partialorder %v248, 0.0
    %vm506 = vcmp.ge.f32.partialorder %v249, 0.0
    %vm507 = vcmp.ge.f32.partialorder %v250, 0.0
    %vm508 = vcmp.ge.f32.partialorder %v251, 0.0
    %vm509 = vcmp.ge.f32.partialorder %v252, 0.0
    %vm510 = vcmp.ge.f32.partialorder %v253, 0.0
    %vm511 = vcmp.ge.f32.partialorder %v254, 0.0
    %vm512 = vcmp.ge.f32.partialorder %v255, 0.0
    %vm513 = vcmp.ge.f32.partialorder %v256, 0.0
    %vm514 = vcmp.ge.f32.partialorder %v257, 0.0
    %vm515 = vcmp.ge.f32.partialorder %v258, 0.0
    %vm516 = vcmp.ge.f32.partialorder %v259, 0.0
    %vm517 = vcmp.ge.f32.partialorder %v260, 0.0
    %vm518 = vcmp.ge.f32.partialorder %v261, 0.0
    %vm519 = vcmp.ge.f32.partialorder %v262, 0.0
    %vm520 = vcmp.ge.f32.partialorder %v263, 0.0
    %vm521 = vcmp.ge.f32.partialorder %v264, 0.0
    %vm522 = vcmp.ge.f32.partialorder %v265, 0.0
    %vm523 = vcmp.ge.f32.partialorder %v266, 0.0
    %vm524 = vcmp.ge.f32.partialorder %v267, 0.0
    %vm525 = vcmp.ge.f32.partialorder %v268, 0.0
    %vm526 = vcmp.ge.f32.partialorder %v269, 0.0
    %vm527 = vcmp.ge.f32.partialorder %v270, 0.0
    %vm528 = vcmp.ge.f32.partialorder %v271, 0.0
    %vm529 = vcmp.ge.f32.partialorder %v272, 0.0
    %vm530 = vcmp.ge.f32.partialorder %v273, 0.0
    %vm531 = vcmp.ge.f32.partialorder %v274, 0.0
    %vm532 = vcmp.ge.f32.partialorder %v275, 0.0
    %vm533 = vcmp.ge.f32.partialorder %v276, 0.0
    %vm534 = vcmp.ge.f32.partialorder %v277, 0.0
    %vm535 = vcmp.ge.f32.partialorder %v278, 0.0
    %vm536 = vcmp.ge.f32.partialorder %v279, 0.0
    %vm537 = vcmp.ge.f32.partialorder %v280, 0.0
    %vm538 = vcmp.ge.f32.partialorder %v281, 0.0
    %vm539 = vcmp.ge.f32.partialorder %v282, 0.0
    %v540 = vstv %s283
    %v541 = vmul.f32 %v27, %v540
    %v542 = vmul.f32 %v28, %v540
    %v543 = vmul.f32 %v29, %v540
    %v544 = vmul.f32 %v30, %v540
    %v545 = vmul.f32 %v31, %v540
    %v546 = vmul.f32 %v32, %v540
    %v547 = vmul.f32 %v33, %v540
    %v548 = vmul.f32 %v34, %v540
    %v549 = vmul.f32 %v35, %v540
    %v550 = vmul.f32 %v36, %v540
    %v551 = vmul.f32 %v37, %v540
    %v552 = vmul.f32 %v38, %v540
    %v553 = vmul.f32 %v39, %v540
    %v554 = vmul.f32 %v40, %v540
    %v555 = vmul.f32 %v41, %v540
    %v556 = vmul.f32 %v42, %v540
    %v557 = vmul.f32 %v43, %v540
    %v558 = vmul.f32 %v44, %v540
    %v559 = vmul.f32 %v45, %v540
    %v560 = vmul.f32 %v46, %v540
    %v561 = vmul.f32 %v47, %v540
    %v562 = vmul.f32 %v48, %v540
    %v563 = vmul.f32 %v49, %v540
    %v564 = vmul.f32 %v50, %v540
    %v565 = vmul.f32 %v51, %v540
    %v566 = vmul.f32 %v52, %v540
    %v567 = vmul.f32 %v53, %v540
    %v568 = vmul.f32 %v54, %v540
    %v569 = vmul.f32 %v55, %v540
    %v570 = vmul.f32 %v56, %v540
    %v571 = vmul.f32 %v57, %v540
    %v572 = vmul.f32 %v58, %v540
    %v573 = vmul.f32 %v59, %v540
    %v574 = vmul.f32 %v60, %v540
    %v575 = vmul.f32 %v61, %v540
    %v576 = vmul.f32 %v62, %v540
    %v577 = vmul.f32 %v63, %v540
    %v578 = vmul.f32 %v64, %v540
    %v579 = vmul.f32 %v65, %v540
    %v580 = vmul.f32 %v66, %v540
    %v581 = vmul.f32 %v67, %v540
    %v582 = vmul.f32 %v68, %v540
    %v583 = vmul.f32 %v69, %v540
    %v584 = vmul.f32 %v70, %v540
    %v585 = vmul.f32 %v71, %v540
    %v586 = vmul.f32 %v72, %v540
    %v587 = vmul.f32 %v73, %v540
    %v588 = vmul.f32 %v74, %v540
    %v589 = vmul.f32 %v75, %v540
    %v590 = vmul.f32 %v76, %v540
    %v591 = vmul.f32 %v77, %v540
    %v592 = vmul.f32 %v78, %v540
    %v593 = vmul.f32 %v79, %v540
    %v594 = vmul.f32 %v80, %v540
    %v595 = vmul.f32 %v81, %v540
    %v596 = vmul.f32 %v82, %v540
    %v597 = vmul.f32 %v83, %v540
    %v598 = vmul.f32 %v84, %v540
    %v599 = vmul.f32 %v85, %v540
    %v600 = vmul.f32 %v86, %v540
    %v601 = vmul.f32 %v87, %v540
    %v602 = vmul.f32 %v88, %v540
    %v603 = vmul.f32 %v89, %v540
    %v604 = vmul.f32 %v90, %v540
    %v605 = vmul.f32 %v91, %v540
    %v606 = vmul.f32 %v92, %v540
    %v607 = vmul.f32 %v93, %v540
    %v608 = vmul.f32 %v94, %v540
    %v609 = vmul.f32 %v95, %v540
    %v610 = vmul.f32 %v96, %v540
    %v611 = vmul.f32 %v97, %v540
    %v612 = vmul.f32 %v98, %v540
    %v613 = vmul.f32 %v99, %v540
    %v614 = vmul.f32 %v100, %v540
    %v615 = vmul.f32 %v101, %v540
    %v616 = vmul.f32 %v102, %v540
    %v617 = vmul.f32 %v103, %v540
    %v618 = vmul.f32 %v104, %v540
    %v619 = vmul.f32 %v105, %v540
    %v620 = vmul.f32 %v106, %v540
    %v621 = vmul.f32 %v107, %v540
    %v622 = vmul.f32 %v108, %v540
    %v623 = vmul.f32 %v109, %v540
    %v624 = vmul.f32 %v110, %v540
    %v625 = vmul.f32 %v111, %v540
    %v626 = vmul.f32 %v112, %v540
    %v627 = vmul.f32 %v113, %v540
    %v628 = vmul.f32 %v114, %v540
    %v629 = vmul.f32 %v115, %v540
    %v630 = vmul.f32 %v116, %v540
    %v631 = vmul.f32 %v117, %v540
    %v632 = vmul.f32 %v118, %v540
    %v633 = vmul.f32 %v119, %v540
    %v634 = vmul.f32 %v120, %v540
    %v635 = vmul.f32 %v121, %v540
    %v636 = vmul.f32 %v122, %v540
    %v637 = vmul.f32 %v123, %v540
    %v638 = vmul.f32 %v124, %v540
    %v639 = vmul.f32 %v125, %v540
    %v640 = vmul.f32 %v126, %v540
    %v641 = vmul.f32 %v127, %v540
    %v642 = vmul.f32 %v128, %v540
    %v643 = vmul.f32 %v129, %v540
    %v644 = vmul.f32 %v130, %v540
    %v645 = vmul.f32 %v131, %v540
    %v646 = vmul.f32 %v132, %v540
    %v647 = vmul.f32 %v133, %v540
    %v648 = vmul.f32 %v134, %v540
    %v649 = vmul.f32 %v135, %v540
    %v650 = vmul.f32 %v136, %v540
    %v651 = vmul.f32 %v137, %v540
    %v652 = vmul.f32 %v138, %v540
    %v653 = vmul.f32 %v139, %v540
    %v654 = vmul.f32 %v140, %v540
    %v655 = vmul.f32 %v141, %v540
    %v656 = vmul.f32 %v142, %v540
    %v657 = vmul.f32 %v143, %v540
    %v658 = vmul.f32 %v144, %v540
    %v659 = vmul.f32 %v145, %v540
    %v660 = vmul.f32 %v146, %v540
    %v661 = vmul.f32 %v147, %v540
    %v662 = vmul.f32 %v148, %v540
    %v663 = vmul.f32 %v149, %v540
    %v664 = vmul.f32 %v150, %v540
    %v665 = vmul.f32 %v151, %v540
    %v666 = vmul.f32 %v152, %v540
    %v667 = vmul.f32 %v153, %v540
    %v668 = vmul.f32 %v154, %v540
    %v669 = vmul.f32 %v155, %v540
    %v670 = vmul.f32 %v156, %v540
    %v671 = vmul.f32 %v157, %v540
    %v672 = vmul.f32 %v158, %v540
    %v673 = vmul.f32 %v159, %v540
    %v674 = vmul.f32 %v160, %v540
    %v675 = vmul.f32 %v161, %v540
    %v676 = vmul.f32 %v162, %v540
    %v677 = vmul.f32 %v163, %v540
    %v678 = vmul.f32 %v164, %v540
    %v679 = vmul.f32 %v165, %v540
    %v680 = vmul.f32 %v166, %v540
    %v681 = vmul.f32 %v167, %v540
    %v682 = vmul.f32 %v168, %v540
    %v683 = vmul.f32 %v169, %v540
    %v684 = vmul.f32 %v170, %v540
    %v685 = vmul.f32 %v171, %v540
    %v686 = vmul.f32 %v172, %v540
    %v687 = vmul.f32 %v173, %v540
    %v688 = vmul.f32 %v174, %v540
    %v689 = vmul.f32 %v175, %v540
    %v690 = vmul.f32 %v176, %v540
    %v691 = vmul.f32 %v177, %v540
    %v692 = vmul.f32 %v178, %v540
    %v693 = vmul.f32 %v179, %v540
    %v694 = vmul.f32 %v180, %v540
    %v695 = vmul.f32 %v181, %v540
    %v696 = vmul.f32 %v182, %v540
    %v697 = vmul.f32 %v183, %v540
    %v698 = vmul.f32 %v184, %v540
    %v699 = vmul.f32 %v185, %v540
    %v700 = vmul.f32 %v186, %v540
    %v701 = vmul.f32 %v187, %v540
    %v702 = vmul.f32 %v188, %v540
    %v703 = vmul.f32 %v189, %v540
    %v704 = vmul.f32 %v190, %v540
    %v705 = vmul.f32 %v191, %v540
    %v706 = vmul.f32 %v192, %v540
    %v707 = vmul.f32 %v193, %v540
    %v708 = vmul.f32 %v194, %v540
    %v709 = vmul.f32 %v195, %v540
    %v710 = vmul.f32 %v196, %v540
    %v711 = vmul.f32 %v197, %v540
    %v712 = vmul.f32 %v198, %v540
    %v713 = vmul.f32 %v199, %v540
    %v714 = vmul.f32 %v200, %v540
    %v715 = vmul.f32 %v201, %v540
    %v716 = vmul.f32 %v202, %v540
    %v717 = vmul.f32 %v203, %v540
    %v718 = vmul.f32 %v204, %v540
    %v719 = vmul.f32 %v205, %v540
    %v720 = vmul.f32 %v206, %v540
    %v721 = vmul.f32 %v207, %v540
    %v722 = vmul.f32 %v208, %v540
    %v723 = vmul.f32 %v209, %v540
    %v724 = vmul.f32 %v210, %v540
    %v725 = vmul.f32 %v211, %v540
    %v726 = vmul.f32 %v212, %v540
    %v727 = vmul.f32 %v213, %v540
    %v728 = vmul.f32 %v214, %v540
    %v729 = vmul.f32 %v215, %v540
    %v730 = vmul.f32 %v216, %v540
    %v731 = vmul.f32 %v217, %v540
    %v732 = vmul.f32 %v218, %v540
    %v733 = vmul.f32 %v219, %v540
    %v734 = vmul.f32 %v220, %v540
    %v735 = vmul.f32 %v221, %v540
    %v736 = vmul.f32 %v222, %v540
    %v737 = vmul.f32 %v223, %v540
    %v738 = vmul.f32 %v224, %v540
    %v739 = vmul.f32 %v225, %v540
    %v740 = vmul.f32 %v226, %v540
    %v741 = vmul.f32 %v227, %v540
    %v742 = vmul.f32 %v228, %v540
    %v743 = vmul.f32 %v229, %v540
    %v744 = vmul.f32 %v230, %v540
    %v745 = vmul.f32 %v231, %v540
    %v746 = vmul.f32 %v232, %v540
    %v747 = vmul.f32 %v233, %v540
    %v748 = vmul.f32 %v234, %v540
    %v749 = vmul.f32 %v235, %v540
    %v750 = vmul.f32 %v236, %v540
    %v751 = vmul.f32 %v237, %v540
    %v752 = vmul.f32 %v238, %v540
    %v753 = vmul.f32 %v239, %v540
    %v754 = vmul.f32 %v240, %v540
    %v755 = vmul.f32 %v241, %v540
    %v756 = vmul.f32 %v242, %v540
    %v757 = vmul.f32 %v243, %v540
    %v758 = vmul.f32 %v244, %v540
    %v759 = vmul.f32 %v245, %v540
    %v760 = vmul.f32 %v246, %v540
    %v761 = vmul.f32 %v247, %v540
    %v762 = vmul.f32 %v248, %v540
    %v763 = vmul.f32 %v249, %v540
    %v764 = vmul.f32 %v250, %v540
    %v765 = vmul.f32 %v251, %v540
    %v766 = vmul.f32 %v252, %v540
    %v767 = vmul.f32 %v253, %v540
    %v768 = vmul.f32 %v254, %v540
    %v769 = vmul.f32 %v255, %v540
    %v770 = vmul.f32 %v256, %v540
    %v771 = vmul.f32 %v257, %v540
    %v772 = vmul.f32 %v258, %v540
    %v773 = vmul.f32 %v259, %v540
    %v774 = vmul.f32 %v260, %v540
    %v775 = vmul.f32 %v261, %v540
    %v776 = vmul.f32 %v262, %v540
    %v777 = vmul.f32 %v263, %v540
    %v778 = vmul.f32 %v264, %v540
    %v779 = vmul.f32 %v265, %v540
    %v780 = vmul.f32 %v266, %v540
    %v781 = vmul.f32 %v267, %v540
    %v782 = vmul.f32 %v268, %v540
    %v783 = vmul.f32 %v269, %v540
    %v784 = vmul.f32 %v270, %v540
    %v785 = vmul.f32 %v271, %v540
    %v786 = vmul.f32 %v272, %v540
    %v787 = vmul.f32 %v273, %v540
    %v788 = vmul.f32 %v274, %v540
    %v789 = vmul.f32 %v275, %v540
    %v790 = vmul.f32 %v276, %v540
    %v791 = vmul.f32 %v277, %v540
    %v792 = vmul.f32 %v278, %v540
    %v793 = vmul.f32 %v279, %v540
    %v794 = vmul.f32 %v280, %v540
    %v795 = vmul.f32 %v281, %v540
    %v796 = vmul.f32 %v282, %v540
    %v797 = vsel %vm284, %v27, %v541
    %v798 = vsel %vm285, %v28, %v542
    %v799 = vsel %vm286, %v29, %v543
    %v800 = vsel %vm287, %v30, %v544
    %v801 = vsel %vm288, %v31, %v545
    %v802 = vsel %vm289, %v32, %v546
    %v803 = vsel %vm290, %v33, %v547
    %v804 = vsel %vm291, %v34, %v548
    %v805 = vsel %vm292, %v35, %v549
    %v806 = vsel %vm293, %v36, %v550
    %v807 = vsel %vm294, %v37, %v551
    %v808 = vsel %vm295, %v38, %v552
    %v809 = vsel %vm296, %v39, %v553
    %v810 = vsel %vm297, %v40, %v554
    %v811 = vsel %vm298, %v41, %v555
    %v812 = vsel %vm299, %v42, %v556
    %v813 = vsel %vm300, %v43, %v557
    %v814 = vsel %vm301, %v44, %v558
    %v815 = vsel %vm302, %v45, %v559
    %v816 = vsel %vm303, %v46, %v560
    %v817 = vsel %vm304, %v47, %v561
    %v818 = vsel %vm305, %v48, %v562
    %v819 = vsel %vm306, %v49, %v563
    %v820 = vsel %vm307, %v50, %v564
    %v821 = vsel %vm308, %v51, %v565
    %v822 = vsel %vm309, %v52, %v566
    %v823 = vsel %vm310, %v53, %v567
    %v824 = vsel %vm311, %v54, %v568
    %v825 = vsel %vm312, %v55, %v569
    %v826 = vsel %vm313, %v56, %v570
    %v827 = vsel %vm314, %v57, %v571
    %v828 = vsel %vm315, %v58, %v572
    %v829 = vsel %vm316, %v59, %v573
    %v830 = vsel %vm317, %v60, %v574
    %v831 = vsel %vm318, %v61, %v575
    %v832 = vsel %vm319, %v62, %v576
    %v833 = vsel %vm320, %v63, %v577
    %v834 = vsel %vm321, %v64, %v578
    %v835 = vsel %vm322, %v65, %v579
    %v836 = vsel %vm323, %v66, %v580
    %v837 = vsel %vm324, %v67, %v581
    %v838 = vsel %vm325, %v68, %v582
    %v839 = vsel %vm326, %v69, %v583
    %v840 = vsel %vm327, %v70, %v584
    %v841 = vsel %vm328, %v71, %v585
    %v842 = vsel %vm329, %v72, %v586
    %v843 = vsel %vm330, %v73, %v587
    %v844 = vsel %vm331, %v74, %v588
    %v845 = vsel %vm332, %v75, %v589
    %v846 = vsel %vm333, %v76, %v590
    %v847 = vsel %vm334, %v77, %v591
    %v848 = vsel %vm335, %v78, %v592
    %v849 = vsel %vm336, %v79, %v593
    %v850 = vsel %vm337, %v80, %v594
    %v851 = vsel %vm338, %v81, %v595
    %v852 = vsel %vm339, %v82, %v596
    %v853 = vsel %vm340, %v83, %v597
    %v854 = vsel %vm341, %v84, %v598
    %v855 = vsel %vm342, %v85, %v599
    %v856 = vsel %vm343, %v86, %v600
    %v857 = vsel %vm344, %v87, %v601
    %v858 = vsel %vm345, %v88, %v602
    %v859 = vsel %vm346, %v89, %v603
    %v860 = vsel %vm347, %v90, %v604
    %v861 = vsel %vm348, %v91, %v605
    %v862 = vsel %vm349, %v92, %v606
    %v863 = vsel %vm350, %v93, %v607
    %v864 = vsel %vm351, %v94, %v608
    %v865 = vsel %vm352, %v95, %v609
    %v866 = vsel %vm353, %v96, %v610
    %v867 = vsel %vm354, %v97, %v611
    %v868 = vsel %vm355, %v98, %v612
    %v869 = vsel %vm356, %v99, %v613
    %v870 = vsel %vm357, %v100, %v614
    %v871 = vsel %vm358, %v101, %v615
    %v872 = vsel %vm359, %v102, %v616
    %v873 = vsel %vm360, %v103, %v617
    %v874 = vsel %vm361, %v104, %v618
    %v875 = vsel %vm362, %v105, %v619
    %v876 = vsel %vm363, %v106, %v620
    %v877 = vsel %vm364, %v107, %v621
    %v878 = vsel %vm365, %v108, %v622
    %v879 = vsel %vm366, %v109, %v623
    %v880 = vsel %vm367, %v110, %v624
    %v881 = vsel %vm368, %v111, %v625
    %v882 = vsel %vm369, %v112, %v626
    %v883 = vsel %vm370, %v113, %v627
    %v884 = vsel %vm371, %v114, %v628
    %v885 = vsel %vm372, %v115, %v629
    %v886 = vsel %vm373, %v116, %v630
    %v887 = vsel %vm374, %v117, %v631
    %v888 = vsel %vm375, %v118, %v632
    %v889 = vsel %vm376, %v119, %v633
    %v890 = vsel %vm377, %v120, %v634
    %v891 = vsel %vm378, %v121, %v635
    %v892 = vsel %vm379, %v122, %v636
    %v893 = vsel %vm380, %v123, %v637
    %v894 = vsel %vm381, %v124, %v638
    %v895 = vsel %vm382, %v125, %v639
    %v896 = vsel %vm383, %v126, %v640
    %v897 = vsel %vm384, %v127, %v641
    %v898 = vsel %vm385, %v128, %v642
    %v899 = vsel %vm386, %v129, %v643
    %v900 = vsel %vm387, %v130, %v644
    %v901 = vsel %vm388, %v131, %v645
    %v902 = vsel %vm389, %v132, %v646
    %v903 = vsel %vm390, %v133, %v647
    %v904 = vsel %vm391, %v134, %v648
    %v905 = vsel %vm392, %v135, %v649
    %v906 = vsel %vm393, %v136, %v650
    %v907 = vsel %vm394, %v137, %v651
    %v908 = vsel %vm395, %v138, %v652
    %v909 = vsel %vm396, %v139, %v653
    %v910 = vsel %vm397, %v140, %v654
    %v911 = vsel %vm398, %v141, %v655
    %v912 = vsel %vm399, %v142, %v656
    %v913 = vsel %vm400, %v143, %v657
    %v914 = vsel %vm401, %v144, %v658
    %v915 = vsel %vm402, %v145, %v659
    %v916 = vsel %vm403, %v146, %v660
    %v917 = vsel %vm404, %v147, %v661
    %v918 = vsel %vm405, %v148, %v662
    %v919 = vsel %vm406, %v149, %v663
    %v920 = vsel %vm407, %v150, %v664
    %v921 = vsel %vm408, %v151, %v665
    %v922 = vsel %vm409, %v152, %v666
    %v923 = vsel %vm410, %v153, %v667
    %v924 = vsel %vm411, %v154, %v668
    %v925 = vsel %vm412, %v155, %v669
    %v926 = vsel %vm413, %v156, %v670
    %v927 = vsel %vm414, %v157, %v671
    %v928 = vsel %vm415, %v158, %v672
    %v929 = vsel %vm416, %v159, %v673
    %v930 = vsel %vm417, %v160, %v674
    %v931 = vsel %vm418, %v161, %v675
    %v932 = vsel %vm419, %v162, %v676
    %v933 = vsel %vm420, %v163, %v677
    %v934 = vsel %vm421, %v164, %v678
    %v935 = vsel %vm422, %v165, %v679
    %v936 = vsel %vm423, %v166, %v680
    %v937 = vsel %vm424, %v167, %v681
    %v938 = vsel %vm425, %v168, %v682
    %v939 = vsel %vm426, %v169, %v683
    %v940 = vsel %vm427, %v170, %v684
    %v941 = vsel %vm428, %v171, %v685
    %v942 = vsel %vm429, %v172, %v686
    %v943 = vsel %vm430, %v173, %v687
    %v944 = vsel %vm431, %v174, %v688
    %v945 = vsel %vm432, %v175, %v689
    %v946 = vsel %vm433, %v176, %v690
    %v947 = vsel %vm434, %v177, %v691
    %v948 = vsel %vm435, %v178, %v692
    %v949 = vsel %vm436, %v179, %v693
    %v950 = vsel %vm437, %v180, %v694
    %v951 = vsel %vm438, %v181, %v695
    %v952 = vsel %vm439, %v182, %v696
    %v953 = vsel %vm440, %v183, %v697
    %v954 = vsel %vm441, %v184, %v698
    %v955 = vsel %vm442, %v185, %v699
    %v956 = vsel %vm443, %v186, %v700
    %v957 = vsel %vm444, %v187, %v701
    %v958 = vsel %vm445, %v188, %v702
    %v959 = vsel %vm446, %v189, %v703
    %v960 = vsel %vm447, %v190, %v704
    %v961 = vsel %vm448, %v191, %v705
    %v962 = vsel %vm449, %v192, %v706
    %v963 = vsel %vm450, %v193, %v707
    %v964 = vsel %vm451, %v194, %v708
    %v965 = vsel %vm452, %v195, %v709
    %v966 = vsel %vm453, %v196, %v710
    %v967 = vsel %vm454, %v197, %v711
    %v968 = vsel %vm455, %v198, %v712
    %v969 = vsel %vm456, %v199, %v713
    %v970 = vsel %vm457, %v200, %v714
    %v971 = vsel %vm458, %v201, %v715
    %v972 = vsel %vm459, %v202, %v716
    %v973 = vsel %vm460, %v203, %v717
    %v974 = vsel %vm461, %v204, %v718
    %v975 = vsel %vm462, %v205, %v719
    %v976 = vsel %vm463, %v206, %v720
    %v977 = vsel %vm464, %v207, %v721
    %v978 = vsel %vm465, %v208, %v722
    %v979 = vsel %vm466, %v209, %v723
    %v980 = vsel %vm467, %v210, %v724
    %v981 = vsel %vm468, %v211, %v725
    %v982 = vsel %vm469, %v212, %v726
    %v983 = vsel %vm470, %v213, %v727
    %v984 = vsel %vm471, %v214, %v728
    %v985 = vsel %vm472, %v215, %v729
    %v986 = vsel %vm473, %v216, %v730
    %v987 = vsel %vm474, %v217, %v731
    %v988 = vsel %vm475, %v218, %v732
    %v989 = vsel %vm476, %v219, %v733
    %v990 = vsel %vm477, %v220, %v734
    %v991 = vsel %vm478, %v221, %v735
    %v992 = vsel %vm479, %v222, %v736
    %v993 = vsel %vm480, %v223, %v737
    %v994 = vsel %vm481, %v224, %v738
    %v995 = vsel %vm482, %v225, %v739
    %v996 = vsel %vm483, %v226, %v740
    %v997 = vsel %vm484, %v227, %v741
    %v998 = vsel %vm485, %v228, %v742
    %v999 = vsel %vm486, %v229, %v743
    %v1000 = vsel %vm487, %v230, %v744
    %v1001 = vsel %vm488, %v231, %v745
    %v1002 = vsel %vm489, %v232, %v746
    %v1003 = vsel %vm490, %v233, %v747
    %v1004 = vsel %vm491, %v234, %v748
    %v1005 = vsel %vm492, %v235, %v749
    %v1006 = vsel %vm493, %v236, %v750
    %v1007 = vsel %vm494, %v237, %v751
    %v1008 = vsel %vm495, %v238, %v752
    %v1009 = vsel %vm496, %v239, %v753
    %v1010 = vsel %vm497, %v240, %v754
    %v1011 = vsel %vm498, %v241, %v755
    %v1012 = vsel %vm499, %v242, %v756
    %v1013 = vsel %vm500, %v243, %v757
    %v1014 = vsel %vm501, %v244, %v758
    %v1015 = vsel %vm502, %v245, %v759
    %v1016 = vsel %vm503, %v246, %v760
    %v1017 = vsel %vm504, %v247, %v761
    %v1018 = vsel %vm505, %v248, %v762
    %v1019 = vsel %vm506, %v249, %v763
    %v1020 = vsel %vm507, %v250, %v764
    %v1021 = vsel %vm508, %v251, %v765
    %v1022 = vsel %vm509, %v252, %v766
    %v1023 = vsel %vm510, %v253, %v767
    %v1024 = vsel %vm511, %v254, %v768
    %v1025 = vsel %vm512, %v255, %v769
    %v1026 = vsel %vm513, %v256, %v770
    %v1027 = vsel %vm514, %v257, %v771
    %v1028 = vsel %vm515, %v258, %v772
    %v1029 = vsel %vm516, %v259, %v773
    %v1030 = vsel %vm517, %v260, %v774
    %v1031 = vsel %vm518, %v261, %v775
    %v1032 = vsel %vm519, %v262, %v776
    %v1033 = vsel %vm520, %v263, %v777
    %v1034 = vsel %vm521, %v264, %v778
    %v1035 = vsel %vm522, %v265, %v779
    %v1036 = vsel %vm523, %v266, %v780
    %v1037 = vsel %vm524, %v267, %v781
    %v1038 = vsel %vm525, %v268, %v782
    %v1039 = vsel %vm526, %v269, %v783
    %v1040 = vsel %vm527, %v270, %v784
    %v1041 = vsel %vm528, %v271, %v785
    %v1042 = vsel %vm529, %v272, %v786
    %v1043 = vsel %vm530, %v273, %v787
    %v1044 = vsel %vm531, %v274, %v788
    %v1045 = vsel %vm532, %v275, %v789
    %v1046 = vsel %vm533, %v276, %v790
    %v1047 = vsel %vm534, %v277, %v791
    %v1048 = vsel %vm535, %v278, %v792
    %v1049 = vsel %vm536, %v279, %v793
    %v1050 = vsel %vm537, %v280, %v794
    %v1051 = vsel %vm538, %v281, %v795
    %v1052 = vsel %vm539, %v282, %v796
    %1053 = vst [vmem:[#allocation6] sm:$0xff] %v797
    %1054 = vst [vmem:[#allocation6 + $0x8] sm:$0xff] %v798
    %1055 = vst [vmem:[#allocation6 + $0x10] sm:$0xff] %v799
    %1056 = vst [vmem:[#allocation6 + $0x18] sm:$0xff] %v800
    %1057 = vst [vmem:[#allocation6 + $0x20] sm:$0xff] %v801
    %1058 = vst [vmem:[#allocation6 + $0x28] sm:$0xff] %v802
    %1059 = vst [vmem:[#allocation6 + $0x30] sm:$0xff] %v803
    %1060 = vst [vmem:[#allocation6 + $0x38] sm:$0xff] %v804
    %1061 = vst [vmem:[#allocation6 + $0x40] sm:$0xff] %v805
    %1062 = vst [vmem:[#allocation6 + $0x48] sm:$0xff] %v806
    %1063 = vst [vmem:[#allocation6 + $0x50] sm:$0xff] %v807
    %1064 = vst [vmem:[#allocation6 + $0x58] sm:$0xff] %v808
    %1065 = vst [vmem:[#allocation6 + $0x60] sm:$0xff] %v809
    %1066 = vst [vmem:[#allocation6 + $0x68] sm:$0xff] %v810
    %1067 = vst [vmem:[#allocation6 + $0x70] sm:$0xff] %v811
    %1068 = vst [vmem:[#allocation6 + $0x78] sm:$0xff] %v812
    %1069 = vst [vmem:[#allocation6 + $0x80] sm:$0xff] %v813
    %1070 = vst [vmem:[#allocation6 + $0x88] sm:$0xff] %v814
    %1071 = vst [vmem:[#allocation6 + $0x90] sm:$0xff] %v815
    %1072 = vst [vmem:[#allocation6 + $0x98] sm:$0xff] %v816
    %1073 = vst [vmem:[#allocation6 + $0xa0] sm:$0xff] %v817
    %1074 = vst [vmem:[#allocation6 + $0xa8] sm:$0xff] %v818
    %1075 = vst [vmem:[#allocation6 + $0xb0] sm:$0xff] %v819
    %1076 = vst [vmem:[#allocation6 + $0xb8] sm:$0xff] %v820
    %1077 = vst [vmem:[#allocation6 + $0xc0] sm:$0xff] %v821
    %1078 = vst [vmem:[#allocation6 + $0xc8] sm:$0xff] %v822
    %1079 = vst [vmem:[#allocation6 + $0xd0] sm:$0xff] %v823
    %1080 = vst [vmem:[#allocation6 + $0xd8] sm:$0xff] %v824
    %1081 = vst [vmem:[#allocation6 + $0xe0] sm:$0xff] %v825
    %1082 = vst [vmem:[#allocation6 + $0xe8] sm:$0xff] %v826
    %1083 = vst [vmem:[#allocation6 + $0xf0] sm:$0xff] %v827
    %1084 = vst [vmem:[#allocation6 + $0xf8] sm:$0xff] %v828
    %1085 = vst [vmem:[#allocation6 + $0x100] sm:$0xff] %v829
    %1086 = vst [vmem:[#allocation6 + $0x108] sm:$0xff] %v830
    %1087 = vst [vmem:[#allocation6 + $0x110] sm:$0xff] %v831
    %1088 = vst [vmem:[#allocation6 + $0x118] sm:$0xff] %v832
    %1089 = vst [vmem:[#allocation6 + $0x120] sm:$0xff] %v833
    %1090 = vst [vmem:[#allocation6 + $0x128] sm:$0xff] %v834
    %1091 = vst [vmem:[#allocation6 + $0x130] sm:$0xff] %v835
    %1092 = vst [vmem:[#allocation6 + $0x138] sm:$0xff] %v836
    %1093 = vst [vmem:[#allocation6 + $0x140] sm:$0xff] %v837
    %1094 = vst [vmem:[#allocation6 + $0x148] sm:$0xff] %v838
    %1095 = vst [vmem:[#allocation6 + $0x150] sm:$0xff] %v839
    %1096 = vst [vmem:[#allocation6 + $0x158] sm:$0xff] %v840
    %1097 = vst [vmem:[#allocation6 + $0x160] sm:$0xff] %v841
    %1098 = vst [vmem:[#allocation6 + $0x168] sm:$0xff] %v842
    %1099 = vst [vmem:[#allocation6 + $0x170] sm:$0xff] %v843
    %1100 = vst [vmem:[#allocation6 + $0x178] sm:$0xff] %v844
    %1101 = vst [vmem:[#allocation6 + $0x180] sm:$0xff] %v845
    %1102 = vst [vmem:[#allocation6 + $0x188] sm:$0xff] %v846
    %1103 = vst [vmem:[#allocation6 + $0x190] sm:$0xff] %v847
    %1104 = vst [vmem:[#allocation6 + $0x198] sm:$0xff] %v848
    %1105 = vst [vmem:[#allocation6 + $0x1a0] sm:$0xff] %v849
    %1106 = vst [vmem:[#allocation6 + $0x1a8] sm:$0xff] %v850
    %1107 = vst [vmem:[#allocation6 + $0x1b0] sm:$0xff] %v851
    %1108 = vst [vmem:[#allocation6 + $0x1b8] sm:$0xff] %v852
    %1109 = vst [vmem:[#allocation6 + $0x1c0] sm:$0xff] %v853
    %1110 = vst [vmem:[#allocation6 + $0x1c8] sm:$0xff] %v854
    %1111 = vst [vmem:[#allocation6 + $0x1d0] sm:$0xff] %v855
    %1112 = vst [vmem:[#allocation6 + $0x1d8] sm:$0xff] %v856
    %1113 = vst [vmem:[#allocation6 + $0x1e0] sm:$0xff] %v857
    %1114 = vst [vmem:[#allocation6 + $0x1e8] sm:$0xff] %v858
    %1115 = vst [vmem:[#allocation6 + $0x1f0] sm:$0xff] %v859
    %1116 = vst [vmem:[#allocation6 + $0x1f8] sm:$0xff] %v860
    %1117 = vst [vmem:[#allocation6 + $0x200] sm:$0xff] %v861
    %1118 = vst [vmem:[#allocation6 + $0x208] sm:$0xff] %v862
    %1119 = vst [vmem:[#allocation6 + $0x210] sm:$0xff] %v863
    %1120 = vst [vmem:[#allocation6 + $0x218] sm:$0xff] %v864
    %1121 = vst [vmem:[#allocation6 + $0x220] sm:$0xff] %v865
    %1122 = vst [vmem:[#allocation6 + $0x228] sm:$0xff] %v866
    %1123 = vst [vmem:[#allocation6 + $0x230] sm:$0xff] %v867
    %1124 = vst [vmem:[#allocation6 + $0x238] sm:$0xff] %v868
    %1125 = vst [vmem:[#allocation6 + $0x240] sm:$0xff] %v869
    %1126 = vst [vmem:[#allocation6 + $0x248] sm:$0xff] %v870
    %1127 = vst [vmem:[#allocation6 + $0x250] sm:$0xff] %v871
    %1128 = vst [vmem:[#allocation6 + $0x258] sm:$0xff] %v872
    %1129 = vst [vmem:[#allocation6 + $0x260] sm:$0xff] %v873
    %1130 = vst [vmem:[#allocation6 + $0x268] sm:$0xff] %v874
    %1131 = vst [vmem:[#allocation6 + $0x270] sm:$0xff] %v875
    %1132 = vst [vmem:[#allocation6 + $0x278] sm:$0xff] %v876
    %1133 = vst [vmem:[#allocation6 + $0x280] sm:$0xff] %v877
    %1134 = vst [vmem:[#allocation6 + $0x288] sm:$0xff] %v878
    %1135 = vst [vmem:[#allocation6 + $0x290] sm:$0xff] %v879
    %1136 = vst [vmem:[#allocation6 + $0x298] sm:$0xff] %v880
    %1137 = vst [vmem:[#allocation6 + $0x2a0] sm:$0xff] %v881
    %1138 = vst [vmem:[#allocation6 + $0x2a8] sm:$0xff] %v882
    %1139 = vst [vmem:[#allocation6 + $0x2b0] sm:$0xff] %v883
    %1140 = vst [vmem:[#allocation6 + $0x2b8] sm:$0xff] %v884
    %1141 = vst [vmem:[#allocation6 + $0x2c0] sm:$0xff] %v885
    %1142 = vst [vmem:[#allocation6 + $0x2c8] sm:$0xff] %v886
    %1143 = vst [vmem:[#allocation6 + $0x2d0] sm:$0xff] %v887
    %1144 = vst [vmem:[#allocation6 + $0x2d8] sm:$0xff] %v888
    %1145 = vst [vmem:[#allocation6 + $0x2e0] sm:$0xff] %v889
    %1146 = vst [vmem:[#allocation6 + $0x2e8] sm:$0xff] %v890
    %1147 = vst [vmem:[#allocation6 + $0x2f0] sm:$0xff] %v891
    %1148 = vst [vmem:[#allocation6 + $0x2f8] sm:$0xff] %v892
    %1149 = vst [vmem:[#allocation6 + $0x300] sm:$0xff] %v893
    %1150 = vst [vmem:[#allocation6 + $0x308] sm:$0xff] %v894
    %1151 = vst [vmem:[#allocation6 + $0x310] sm:$0xff] %v895
    %1152 = vst [vmem:[#allocation6 + $0x318] sm:$0xff] %v896
    %1153 = vst [vmem:[#allocation6 + $0x320] sm:$0xff] %v897
    %1154 = vst [vmem:[#allocation6 + $0x328] sm:$0xff] %v898
    %1155 = vst [vmem:[#allocation6 + $0x330] sm:$0xff] %v899
    %1156 = vst [vmem:[#allocation6 + $0x338] sm:$0xff] %v900
    %1157 = vst [vmem:[#allocation6 + $0x340] sm:$0xff] %v901
    %1158 = vst [vmem:[#allocation6 + $0x348] sm:$0xff] %v902
    %1159 = vst [vmem:[#allocation6 + $0x350] sm:$0xff] %v903
    %1160 = vst [vmem:[#allocation6 + $0x358] sm:$0xff] %v904
    %1161 = vst [vmem:[#allocation6 + $0x360] sm:$0xff] %v905
    %1162 = vst [vmem:[#allocation6 + $0x368] sm:$0xff] %v906
    %1163 = vst [vmem:[#allocation6 + $0x370] sm:$0xff] %v907
    %1164 = vst [vmem:[#allocation6 + $0x378] sm:$0xff] %v908
    %1165 = vst [vmem:[#allocation6 + $0x380] sm:$0xff] %v909
    %1166 = vst [vmem:[#allocation6 + $0x388] sm:$0xff] %v910
    %1167 = vst [vmem:[#allocation6 + $0x390] sm:$0xff] %v911
    %1168 = vst [vmem:[#allocation6 + $0x398] sm:$0xff] %v912
    %1169 = vst [vmem:[#allocation6 + $0x3a0] sm:$0xff] %v913
    %1170 = vst [vmem:[#allocation6 + $0x3a8] sm:$0xff] %v914
    %1171 = vst [vmem:[#allocation6 + $0x3b0] sm:$0xff] %v915
    %1172 = vst [vmem:[#allocation6 + $0x3b8] sm:$0xff] %v916
    %1173 = vst [vmem:[#allocation6 + $0x3c0] sm:$0xff] %v917
    %1174 = vst [vmem:[#allocation6 + $0x3c8] sm:$0xff] %v918
    %1175 = vst [vmem:[#allocation6 + $0x3d0] sm:$0xff] %v919
    %1176 = vst [vmem:[#allocation6 + $0x3d8] sm:$0xff] %v920
    %1177 = vst [vmem:[#allocation6 + $0x3e0] sm:$0xff] %v921
    %1178 = vst [vmem:[#allocation6 + $0x3e8] sm:$0xff] %v922
    %1179 = vst [vmem:[#allocation6 + $0x3f0] sm:$0xff] %v923
    %1180 = vst [vmem:[#allocation6 + $0x3f8] sm:$0xff] %v924
    %1181 = vst [vmem:[#allocation6 + $0x400] sm:$0xff] %v925
    %1182 = vst [vmem:[#allocation6 + $0x408] sm:$0xff] %v926
    %1183 = vst [vmem:[#allocation6 + $0x410] sm:$0xff] %v927
    %1184 = vst [vmem:[#allocation6 + $0x418] sm:$0xff] %v928
    %1185 = vst [vmem:[#allocation6 + $0x420] sm:$0xff] %v929
    %1186 = vst [vmem:[#allocation6 + $0x428] sm:$0xff] %v930
    %1187 = vst [vmem:[#allocation6 + $0x430] sm:$0xff] %v931
    %1188 = vst [vmem:[#allocation6 + $0x438] sm:$0xff] %v932
    %1189 = vst [vmem:[#allocation6 + $0x440] sm:$0xff] %v933
    %1190 = vst [vmem:[#allocation6 + $0x448] sm:$0xff] %v934
    %1191 = vst [vmem:[#allocation6 + $0x450] sm:$0xff] %v935
    %1192 = vst [vmem:[#allocation6 + $0x458] sm:$0xff] %v936
    %1193 = vst [vmem:[#allocation6 + $0x460] sm:$0xff] %v937
    %1194 = vst [vmem:[#allocation6 + $0x468] sm:$0xff] %v938
    %1195 = vst [vmem:[#allocation6 + $0x470] sm:$0xff] %v939
    %1196 = vst [vmem:[#allocation6 + $0x478] sm:$0xff] %v940
    %1197 = vst [vmem:[#allocation6 + $0x480] sm:$0xff] %v941
    %1198 = vst [vmem:[#allocation6 + $0x488] sm:$0xff] %v942
    %1199 = vst [vmem:[#allocation6 + $0x490] sm:$0xff] %v943
    %1200 = vst [vmem:[#allocation6 + $0x498] sm:$0xff] %v944
    %1201 = vst [vmem:[#allocation6 + $0x4a0] sm:$0xff] %v945
    %1202 = vst [vmem:[#allocation6 + $0x4a8] sm:$0xff] %v946
    %1203 = vst [vmem:[#allocation6 + $0x4b0] sm:$0xff] %v947
    %1204 = vst [vmem:[#allocation6 + $0x4b8] sm:$0xff] %v948
    %1205 = vst [vmem:[#allocation6 + $0x4c0] sm:$0xff] %v949
    %1206 = vst [vmem:[#allocation6 + $0x4c8] sm:$0xff] %v950
    %1207 = vst [vmem:[#allocation6 + $0x4d0] sm:$0xff] %v951
    %1208 = vst [vmem:[#allocation6 + $0x4d8] sm:$0xff] %v952
    %1209 = vst [vmem:[#allocation6 + $0x4e0] sm:$0xff] %v953
    %1210 = vst [vmem:[#allocation6 + $0x4e8] sm:$0xff] %v954
    %1211 = vst [vmem:[#allocation6 + $0x4f0] sm:$0xff] %v955
    %1212 = vst [vmem:[#allocation6 + $0x4f8] sm:$0xff] %v956
    %1213 = vst [vmem:[#allocation6 + $0x500] sm:$0xff] %v957
    %1214 = vst [vmem:[#allocation6 + $0x508] sm:$0xff] %v958
    %1215 = vst [vmem:[#allocation6 + $0x510] sm:$0xff] %v959
    %1216 = vst [vmem:[#allocation6 + $0x518] sm:$0xff] %v960
    %1217 = vst [vmem:[#allocation6 + $0x520] sm:$0xff] %v961
    %1218 = vst [vmem:[#allocation6 + $0x528] sm:$0xff] %v962
    %1219 = vst [vmem:[#allocation6 + $0x530] sm:$0xff] %v963
    %1220 = vst [vmem:[#allocation6 + $0x538] sm:$0xff] %v964
    %1221 = vst [vmem:[#allocation6 + $0x540] sm:$0xff] %v965
    %1222 = vst [vmem:[#allocation6 + $0x548] sm:$0xff] %v966
    %1223 = vst [vmem:[#allocation6 + $0x550] sm:$0xff] %v967
    %1224 = vst [vmem:[#allocation6 + $0x558] sm:$0xff] %v968
    %1225 = vst [vmem:[#allocation6 + $0x560] sm:$0xff] %v969
    %1226 = vst [vmem:[#allocation6 + $0x568] sm:$0xff] %v970
    %1227 = vst [vmem:[#allocation6 + $0x570] sm:$0xff] %v971
    %1228 = vst [vmem:[#allocation6 + $0x578] sm:$0xff] %v972
    %1229 = vst [vmem:[#allocation6 + $0x580] sm:$0xff] %v973
    %1230 = vst [vmem:[#allocation6 + $0x588] sm:$0xff] %v974
    %1231 = vst [vmem:[#allocation6 + $0x590] sm:$0xff] %v975
    %1232 = vst [vmem:[#allocation6 + $0x598] sm:$0xff] %v976
    %1233 = vst [vmem:[#allocation6 + $0x5a0] sm:$0xff] %v977
    %1234 = vst [vmem:[#allocation6 + $0x5a8] sm:$0xff] %v978
    %1235 = vst [vmem:[#allocation6 + $0x5b0] sm:$0xff] %v979
    %1236 = vst [vmem:[#allocation6 + $0x5b8] sm:$0xff] %v980
    %1237 = vst [vmem:[#allocation6 + $0x5c0] sm:$0xff] %v981
    %1238 = vst [vmem:[#allocation6 + $0x5c8] sm:$0xff] %v982
    %1239 = vst [vmem:[#allocation6 + $0x5d0] sm:$0xff] %v983
    %1240 = vst [vmem:[#allocation6 + $0x5d8] sm:$0xff] %v984
    %1241 = vst [vmem:[#allocation6 + $0x5e0] sm:$0xff] %v985
    %1242 = vst [vmem:[#allocation6 + $0x5e8] sm:$0xff] %v986
    %1243 = vst [vmem:[#allocation6 + $0x5f0] sm:$0xff] %v987
    %1244 = vst [vmem:[#allocation6 + $0x5f8] sm:$0xff] %v988
    %1245 = vst [vmem:[#allocation6 + $0x600] sm:$0xff] %v989
    %1246 = vst [vmem:[#allocation6 + $0x608] sm:$0xff] %v990
    %1247 = vst [vmem:[#allocation6 + $0x610] sm:$0xff] %v991
    %1248 = vst [vmem:[#allocation6 + $0x618] sm:$0xff] %v992
    %1249 = vst [vmem:[#allocation6 + $0x620] sm:$0xff] %v993
    %1250 = vst [vmem:[#allocation6 + $0x628] sm:$0xff] %v994
    %1251 = vst [vmem:[#allocation6 + $0x630] sm:$0xff] %v995
    %1252 = vst [vmem:[#allocation6 + $0x638] sm:$0xff] %v996
    %1253 = vst [vmem:[#allocation6 + $0x640] sm:$0xff] %v997
    %1254 = vst [vmem:[#allocation6 + $0x648] sm:$0xff] %v998
    %1255 = vst [vmem:[#allocation6 + $0x650] sm:$0xff] %v999
    %1256 = vst [vmem:[#allocation6 + $0x658] sm:$0xff] %v1000
    %1257 = vst [vmem:[#allocation6 + $0x660] sm:$0xff] %v1001
    %1258 = vst [vmem:[#allocation6 + $0x668] sm:$0xff] %v1002
    %1259 = vst [vmem:[#allocation6 + $0x670] sm:$0xff] %v1003
    %1260 = vst [vmem:[#allocation6 + $0x678] sm:$0xff] %v1004
    %1261 = vst [vmem:[#allocation6 + $0x680] sm:$0xff] %v1005
    %1262 = vst [vmem:[#allocation6 + $0x688] sm:$0xff] %v1006
    %1263 = vst [vmem:[#allocation6 + $0x690] sm:$0xff] %v1007
    %1264 = vst [vmem:[#allocation6 + $0x698] sm:$0xff] %v1008
    %1265 = vst [vmem:[#allocation6 + $0x6a0] sm:$0xff] %v1009
    %1266 = vst [vmem:[#allocation6 + $0x6a8] sm:$0xff] %v1010
    %1267 = vst [vmem:[#allocation6 + $0x6b0] sm:$0xff] %v1011
    %1268 = vst [vmem:[#allocation6 + $0x6b8] sm:$0xff] %v1012
    %1269 = vst [vmem:[#allocation6 + $0x6c0] sm:$0xff] %v1013
    %1270 = vst [vmem:[#allocation6 + $0x6c8] sm:$0xff] %v1014
    %1271 = vst [vmem:[#allocation6 + $0x6d0] sm:$0xff] %v1015
    %1272 = vst [vmem:[#allocation6 + $0x6d8] sm:$0xff] %v1016
    %1273 = vst [vmem:[#allocation6 + $0x6e0] sm:$0xff] %v1017
    %1274 = vst [vmem:[#allocation6 + $0x6e8] sm:$0xff] %v1018
    %1275 = vst [vmem:[#allocation6 + $0x6f0] sm:$0xff] %v1019
    %1276 = vst [vmem:[#allocation6 + $0x6f8] sm:$0xff] %v1020
    %1277 = vst [vmem:[#allocation6 + $0x700] sm:$0xff] %v1021
    %1278 = vst [vmem:[#allocation6 + $0x708] sm:$0xff] %v1022
    %1279 = vst [vmem:[#allocation6 + $0x710] sm:$0xff] %v1023
    %1280 = vst [vmem:[#allocation6 + $0x718] sm:$0xff] %v1024
    %1281 = vst [vmem:[#allocation6 + $0x720] sm:$0xff] %v1025
    %1282 = vst [vmem:[#allocation6 + $0x728] sm:$0xff] %v1026
    %1283 = vst [vmem:[#allocation6 + $0x730] sm:$0xff] %v1027
    %1284 = vst [vmem:[#allocation6 + $0x738] sm:$0xff] %v1028
    %1285 = vst [vmem:[#allocation6 + $0x740] sm:$0xff] %v1029
    %1286 = vst [vmem:[#allocation6 + $0x748] sm:$0xff] %v1030
    %1287 = vst [vmem:[#allocation6 + $0x750] sm:$0xff] %v1031
    %1288 = vst [vmem:[#allocation6 + $0x758] sm:$0xff] %v1032
    %1289 = vst [vmem:[#allocation6 + $0x760] sm:$0xff] %v1033
    %1290 = vst [vmem:[#allocation6 + $0x768] sm:$0xff] %v1034
    %1291 = vst [vmem:[#allocation6 + $0x770] sm:$0xff] %v1035
    %1292 = vst [vmem:[#allocation6 + $0x778] sm:$0xff] %v1036
    %1293 = vst [vmem:[#allocation6 + $0x780] sm:$0xff] %v1037
    %1294 = vst [vmem:[#allocation6 + $0x788] sm:$0xff] %v1038
    %1295 = vst [vmem:[#allocation6 + $0x790] sm:$0xff] %v1039
    %1296 = vst [vmem:[#allocation6 + $0x798] sm:$0xff] %v1040
    %1297 = vst [vmem:[#allocation6 + $0x7a0] sm:$0xff] %v1041
    %1298 = vst [vmem:[#allocation6 + $0x7a8] sm:$0xff] %v1042
    %1299 = vst [vmem:[#allocation6 + $0x7b0] sm:$0xff] %v1043
    %1300 = vst [vmem:[#allocation6 + $0x7b8] sm:$0xff] %v1044
    %1301 = vst [vmem:[#allocation6 + $0x7c0] sm:$0xff] %v1045
    %1302 = vst [vmem:[#allocation6 + $0x7c8] sm:$0xff] %v1046
    %1303 = vst [vmem:[#allocation6 + $0x7d0] sm:$0xff] %v1047
    %1304 = vst [vmem:[#allocation6 + $0x7d8] sm:$0xff] %v1048
    %1305 = vst [vmem:[#allocation6 + $0x7e0] sm:$0xff] %v1049
    %1306 = vst [vmem:[#allocation6 + $0x7e8] sm:$0xff] %v1050
    %1307 = vst [vmem:[#allocation6 + $0x7f0] sm:$0xff] %v1051
    %1308 = vst [vmem:[#allocation6 + $0x7f8] sm:$0xff] %v1052
    // Predicated region
    $region14: #{tpu_custom_call.1} parent=1 // pred_check
      _
    $region15: #{tpu_custom_call.1} parent=1 // pred_check_branch
      %1310 = sbr.rel (0) target = $region17
    $region16: #{tpu_custom_call.1} parent=1 // pred_region
      %s1312 = ssub.s32 32768, 32768
      %1313 = vsyncadd [#allocation5], %s1312
      %s1314 = sshll.u32 [#allocation6], 4
      %s1315 = int_to_ptr.vmem [resolvable:$true] %s1314
      %1320 = dma.vmem_to_hbm [thread:$0]  %s1315, 32768, %s2, [#allocation5], 4096, 4096, 256
    $region17: #{tpu_custom_call.1} parent=1 // pred_fallthru
      _
    // Predicated region
    $region18: #{tpu_custom_call.1} parent=1 // pred_check
      _
    $region19: #{tpu_custom_call.1} parent=1 // pred_check_branch
      %1322 = sbr.rel (0) target = $region21
    $region20: #{tpu_custom_call.1} parent=1 // pred_region
      %1323 = dma.done [#allocation5], 32768
    $region21: #{tpu_custom_call.1} parent=1 // pred_fallthru
      _
    %1324 = vsyncpa [#allocation4], 1
    %1325 = vsyncpa [#allocation5], 1

</llo_original>
